<compile_context>
chip_gen: v6e
topology: v6e:2x2x1
jax: 0.10.0
libtpu: 0.0.40
codegen_flags: <defaults>
</compile_context>

<pallas_src>
import functools

import jax
import jax.numpy as jnp
from jax.experimental import pallas as pl
from jax.experimental.pallas import tpu as pltpu

DEPTH = 10          # len(self.diffusion)
DIFFUSION = 0.9     # diffusion coefficient
LANE = 128          # TPU lane width
# default ctor: layers=2 -> no additional_layers; reuse_feats=True


def universalp_kernel(x_ref, a_ref, w1_ref, b1_ref, w2p_ref, b2p_ref,
                      wft_ref, a1b_ref, wci_ref,
                      wcol_ref, a2w_ref, a2b_ref,
                      out_ref, *, hidden2):
    x = x_ref[...]                    # [N, F] f32
    a_s = a_ref[...]                  # [N, N], pre-scaled by 0.9, already in diffusion dtype
    diff_dtype = a_s.dtype

    # ---------- feature MLP (f32): relu(x W1 + b1) W2p + b2p -> [N, CP] ----------
    # W2/b2 zero-padded to CP lanes in the wrapper: z is lane-dense, padded lanes are 0.
    h = jnp.maximum(
        jnp.dot(x, w1_ref[...], preferred_element_type=jnp.float32) + b1_ref[...], 0.0)
    z = jnp.dot(h, w2p_ref[...], preferred_element_type=jnp.float32) + b2p_ref[...]

    # ---------- first diffusion (personalized pagerank), lane-dense [N, CP] ------
    # a_s already carries the 0.9 factor, so each step is one matmul + one add.
    h0s = (1.0 - DIFFUSION) * z       # hoisted loop invariant
    for _ in range(DEPTH):
        z = jnp.dot(a_s, z.astype(diff_dtype),
                    preferred_element_type=jnp.float32) + h0s

    # ---------- per-class "adjust" MLP: loop over H2, class dim stays in lanes ----
    # Row (c*N + n) of adjust1(big) == z[n,c]*A1w[0,:] + A1w[1+c,:] + x[n,:]@A1w[1+C:,:] + b.
    # Equivalently, for each hidden unit h:
    #   z2[:, c] += relu(z[:, c]*w_col[h] + w_ci[c, h] + base[:, h]) * a2w[h]
    # which is pure full-width 128-lane VPU work (no XLU reductions, no masked stores).
    base = jnp.dot(x, wft_ref[...],
                   preferred_element_type=jnp.float32) + a1b_ref[...]       # [N, H2]
    wci = wci_ref[...]                                                      # [H2, CP]
    acc = jnp.zeros(out_ref.shape, jnp.float32)                             # [N, CP]
    for hd in range(hidden2):
        pre = z * wcol_ref[hd] + wci[hd:hd + 1, :] + base[:, hd:hd + 1]
        acc = acc + jnp.maximum(pre, 0.0) * a2w_ref[hd]
    z2 = acc + a2b_ref[0]             # padded class lanes become nonzero; sliced off outside

    # ---------- second diffusion ---------------------------------------------------
    h0s = (1.0 - DIFFUSION) * z2
    for _ in range(DEPTH):
        z2 = jnp.dot(a_s, z2.astype(diff_dtype),
                     preferred_element_type=jnp.float32) + h0s

    out_ref[...] = z2                 # single lane-dense [N, CP] store


def universalp_forward(x, a_norm, params, *, diff_dtype=jnp.bfloat16):
    n, feats = x.shape
    hidden = params["w1"].shape[1]
    classes = params["w2"].shape[1]
    hidden2 = params["a1w"].shape[1]                          # 3 + feats (reuse_feats=True)
    cp = max(LANE, ((classes + LANE - 1) // LANE) * LANE)     # lane-dense class dim

    # ----- wrapper-side layout plumbing (cacheable alongside the adjacency) -------
    a_scaled = (DIFFUSION * a_norm).astype(diff_dtype)        # fold 0.9 into A, cast once
    w2p = jnp.zeros((hidden, cp), jnp.float32).at[:, :classes].set(params["w2"])
    b2p = jnp.zeros((1, cp), jnp.float32).at[:, :classes].set(params["b2"])
    a1w = params["a1w"]                                       # [1 + C + F, H2]
    w_col = a1w[0, :]                                         # (H2,)  value-column weights
    wci_pad = jnp.zeros((hidden2, cp), jnp.float32).at[:, :classes].set(
        a1w[1:1 + classes, :].T)                              # [H2, CP] class one-hot rows
    w_ft = a1w[1 + classes:, :]                               # [F, H2]  reused-feature rows
    a2w = params["a2w"][:, 0]                                 # (H2,)
    a2b = params["a2b"][0]                                    # (1,)

    vmem_args = (x, a_scaled, params["w1"], params["b1"], w2p, b2p,
                 w_ft, params["a1b"], wci_pad)
    smem_args = (w_col, a2w, a2b)
    args = vmem_args + smem_args

    # ----- VMEM budget: real footprint, capped by device capacity ------------------
    arg_bytes = sum(int(v.size) * v.dtype.itemsize for v in args)
    out_bytes = n * cp * 4
    temp_bytes = 8 * n * cp * 4                               # z, h0s, acc, pre, bf16 staging
    needed = arg_bytes + out_bytes + temp_bytes + (4 << 20)
    try:
        capacity = int(pltpu.get_tpu_info().vmem_capacity_bytes)
    except Exception:
        capacity = 128 << 20
    vmem_limit = int(min(max(needed, 32 << 20), capacity - (8 << 20)))

    flops = (4 * DEPTH * n * n * cp                           # 2 diffusion loops
             + 2 * n * feats * hidden + 2 * n * hidden * cp   # feature MLP
             + 2 * n * feats * hidden2 + 6 * hidden2 * n * cp)  # adjust stage
    cost = pl.CostEstimate(flops=int(flops), transcendentals=0,
                           bytes_accessed=int(arg_bytes + out_bytes))

    kernel = functools.partial(universalp_kernel, hidden2=hidden2)
    out = pl.pallas_call(
        kernel,
        out_shape=jax.ShapeDtypeStruct((n, cp), jnp.float32),
        in_specs=[pl.BlockSpec(memory_space=pltpu.MemorySpace.VMEM)] * len(vmem_args)
                 + [pl.BlockSpec(memory_space=pltpu.MemorySpace.SMEM)] * len(smem_args),
        out_specs=pl.BlockSpec(memory_space=pltpu.MemorySpace.VMEM),
        compiler_params=pltpu.CompilerParams(vmem_limit_bytes=vmem_limit),
        cost_estimate=cost,
    )(*args)
    return out[:, :classes]


# ---------------------------------------------------------------------------
# Glue: parameter init (torch.nn.Linear-style uniform) + cached GraphConv adjacency.
# ---------------------------------------------------------------------------
def linear_params(key, fan_in, fan_out):
    k = 1.0 / jnp.sqrt(jnp.float32(fan_in))
    kw, kb = jax.random.split(key)
    w = jax.random.uniform(kw, (fan_in, fan_out), jnp.float32, -k, k)
    b = jax.random.uniform(kb, (1, fan_out), jnp.float32, -k, k)
    return w, b


def make_params(key, feats, classes, hidden):
    k1, k2, k3, k4 = jax.random.split(key, 4)
    hidden2 = 3 + feats  # reuse_feats=True
    w1, b1 = linear_params(k1, feats, hidden)
    w2, b2 = linear_params(k2, hidden, classes)
    a1w, a1b = linear_params(k3, 1 + classes + feats, hidden2)
    a2w, a2b = linear_params(k4, hidden2, 1)
    return dict(w1=w1, b1=b1, w2=w2, b2=b2, a1w=a1w, a1b=a1b, a2w=a2w, a2b=a2b)


def build_norm_adj(edges, n):
    # GCN-style symmetric normalization with self-loops, D^{-1/2}(A+I)D^{-1/2}, densified.
    a = jnp.zeros((n, n), jnp.float32)
    a = a.at[edges[0], edges[1]].set(1.0)
    a = a.at[edges[1], edges[0]].set(1.0)
    a = a + jnp.eye(n, dtype=jnp.float32)
    dinv = 1.0 / jnp.sqrt(jnp.sum(a, axis=1))
    return a * dinv[:, None] * dinv[None, :]


def reference_forward(x, a, p, classes, diff_dtype=jnp.float32, fold_scale=False):
    """Pure-JAX reference. fold_scale=False is the literal torch translation; fold_scale=True
    mirrors the kernel's numeric choice of pre-scaling A by the diffusion coefficient."""
    n = x.shape[0]
    a_d = ((DIFFUSION * a) if fold_scale else a).astype(diff_dtype)

    def diffuse(z):
        h0 = z
        for _ in range(DEPTH):
            az = jnp.dot(a_d, z.astype(diff_dtype), preferred_element_type=jnp.float32)
            z = (az if fold_scale else DIFFUSION * az) + (1.0 - DIFFUSION) * h0
        return z

    h = jax.nn.relu(x @ p["w1"] + p["b1"])
    z = h @ p["w2"] + p["b2"]
    z = diffuse(z)
    col = z.T.reshape(-1, 1)
    ci = jnp.zeros((n * classes, classes), jnp.float32)
    ci = ci.at[jnp.arange(n * classes), jnp.arange(n * classes) // n].set(1.0)
    xr = jnp.tile(x, (classes, 1))
    big = jnp.concatenate([col, ci, xr], axis=1)
    hh = jax.nn.relu(big @ p["a1w"] + p["a1b"])
    v = hh @ p["a2w"] + p["a2b"]
    z2 = v.reshape(classes, n).T
    return diffuse(z2)


if __name__ == "__main__":
    N, FEATS, CLASSES, HIDDEN = 16, 8, 4, 32

    key = jax.random.PRNGKey(0)
    kx, kp = jax.random.split(key)
    x = jax.random.normal(kx, (N, FEATS), jnp.float32)

    # simple deterministic graph: a ring
    src = jnp.arange(N, dtype=jnp.int32)
    dst = (src + 1) % N
    edges = jnp.stack([src, dst], axis=0)
    a_norm = build_norm_adj(edges, N)

    params = make_params(kp, FEATS, CLASSES, HIDDEN)

    # Exact-semantics check: f32 diffusion vs literal torch translation.
    out_f32 = jax.block_until_ready(
        universalp_forward(x, a_norm, params, diff_dtype=jnp.float32))
    ref_f32 = reference_forward(x, a_norm, params, CLASSES,
                                diff_dtype=jnp.float32, fold_scale=False)
    assert out_f32.shape == (N, CLASSES)
    assert jnp.allclose(out_f32, ref_f32, atol=1e-4, rtol=1e-4), \
        "f32 Pallas kernel mismatch vs reference"

    # Perf configuration: pre-scaled bf16 adjacency for the 20 diffusion matmuls
    # (f32 MXU accumulation), validated against a reference applying the same numerics.
    out_bf16 = jax.block_until_ready(
        universalp_forward(x, a_norm, params, diff_dtype=jnp.bfloat16))
    ref_bf16 = reference_forward(x, a_norm, params, CLASSES,
                                 diff_dtype=jnp.bfloat16, fold_scale=True)
    assert jnp.allclose(out_bf16, ref_bf16, atol=1e-2, rtol=1e-2), \
        "bf16-diffusion Pallas kernel mismatch vs bf16 reference"
    # Informational only: drift of the bf16 fast path vs exact f32 semantics over 20 hops.
    _drift_vs_f32 = float(jnp.max(jnp.abs(out_bf16 - ref_f32)))

    print("KERNEL_OK")
</pallas_src>

<mosaic_0001>
module attributes {stable_mosaic.version = 11 : i64} {
  func.func @universalp_kernel(%arg0: memref<16x8xf32, #tpu.memory_space<vmem>>, %arg1: memref<16x16xf32, #tpu.memory_space<vmem>>, %arg2: memref<8x32xf32, #tpu.memory_space<vmem>>, %arg3: memref<1x32xf32, #tpu.memory_space<vmem>>, %arg4: memref<32x128xf32, #tpu.memory_space<vmem>>, %arg5: memref<1x128xf32, #tpu.memory_space<vmem>>, %arg6: memref<8x11xf32, #tpu.memory_space<vmem>>, %arg7: memref<1x11xf32, #tpu.memory_space<vmem>>, %arg8: memref<11x128xf32, #tpu.memory_space<vmem>>, %arg9: memref<11xf32, #tpu.memory_space<smem>>, %arg10: memref<11xf32, #tpu.memory_space<smem>>, %arg11: memref<1xf32, #tpu.memory_space<smem>>, %arg12: memref<16x128xf32, #tpu.memory_space<vmem>>) attributes {dimension_semantics = [], scalar_prefetch = 0 : i64, scratch_operands = 0 : i64, tpu.core_type = #tpu.core_type<tc>} {
    %c0 = arith.constant 0 : index
    %c0_0 = arith.constant 0 : index
    %0 = vector.load %arg0[%c0, %c0_0] : memref<16x8xf32, #tpu.memory_space<vmem>>, vector<16x8xf32>
    %c0_1 = arith.constant 0 : index
    %c0_2 = arith.constant 0 : index
    %1 = vector.load %arg1[%c0_1, %c0_2] : memref<16x16xf32, #tpu.memory_space<vmem>>, vector<16x16xf32>
    %c0_3 = arith.constant 0 : index
    %c0_4 = arith.constant 0 : index
    %2 = vector.load %arg2[%c0_3, %c0_4] : memref<8x32xf32, #tpu.memory_space<vmem>>, vector<8x32xf32>
    %cst = arith.constant dense<0.000000e+00> : vector<16x32xf32>
    %3 = tpu.matmul %0, %2, %cst {dimension_numbers = #tpu.dot_dimension_numbers<[1], [0], [0], [1], [0, 0, 1, 1], [], []>} : vector<16x8xf32>, vector<8x32xf32>, vector<16x32xf32> -> vector<16x32xf32>
    %c0_5 = arith.constant 0 : index
    %c0_6 = arith.constant 0 : index
    %4 = vector.load %arg3[%c0_5, %c0_6] : memref<1x32xf32, #tpu.memory_space<vmem>>, vector<1x32xf32>
    %5 = vector.broadcast %4 : vector<1x32xf32> to vector<16x32xf32>
    %6 = arith.addf %3, %5 : vector<16x32xf32>
    %cst_7 = arith.constant 0.000000e+00 : f32
    %7 = vector.broadcast %cst_7 : f32 to vector<16x32xf32>
    %8 = arith.maximumf %6, %7 : vector<16x32xf32>
    %c0_8 = arith.constant 0 : index
    %c0_9 = arith.constant 0 : index
    %9 = vector.load %arg4[%c0_8, %c0_9] : memref<32x128xf32, #tpu.memory_space<vmem>>, vector<32x128xf32>
    %cst_10 = arith.constant dense<0.000000e+00> : vector<16x128xf32>
    %10 = tpu.matmul %8, %9, %cst_10 {dimension_numbers = #tpu.dot_dimension_numbers<[1], [0], [0], [1], [0, 0, 1, 1], [], []>} : vector<16x32xf32>, vector<32x128xf32>, vector<16x128xf32> -> vector<16x128xf32>
    %c0_11 = arith.constant 0 : index
    %c0_12 = arith.constant 0 : index
    %11 = vector.load %arg5[%c0_11, %c0_12] : memref<1x128xf32, #tpu.memory_space<vmem>>, vector<1x128xf32>
    %12 = vector.broadcast %11 : vector<1x128xf32> to vector<16x128xf32>
    %13 = arith.addf %10, %12 : vector<16x128xf32>
    %cst_13 = arith.constant 1.000000e-01 : f32
    %14 = vector.broadcast %cst_13 : f32 to vector<16x128xf32>
    %15 = arith.mulf %14, %13 : vector<16x128xf32>
    %cst_14 = arith.constant dense<0.000000e+00> : vector<16x128xf32>
    %16 = tpu.matmul %1, %13, %cst_14 {dimension_numbers = #tpu.dot_dimension_numbers<[1], [0], [0], [1], [0, 0, 1, 1], [], []>} : vector<16x16xf32>, vector<16x128xf32>, vector<16x128xf32> -> vector<16x128xf32>
    %17 = arith.addf %16, %15 : vector<16x128xf32>
    %cst_15 = arith.constant dense<0.000000e+00> : vector<16x128xf32>
    %18 = tpu.matmul %1, %17, %cst_15 {dimension_numbers = #tpu.dot_dimension_numbers<[1], [0], [0], [1], [0, 0, 1, 1], [], []>} : vector<16x16xf32>, vector<16x128xf32>, vector<16x128xf32> -> vector<16x128xf32>
    %19 = arith.addf %18, %15 : vector<16x128xf32>
    %cst_16 = arith.constant dense<0.000000e+00> : vector<16x128xf32>
    %20 = tpu.matmul %1, %19, %cst_16 {dimension_numbers = #tpu.dot_dimension_numbers<[1], [0], [0], [1], [0, 0, 1, 1], [], []>} : vector<16x16xf32>, vector<16x128xf32>, vector<16x128xf32> -> vector<16x128xf32>
    %21 = arith.addf %20, %15 : vector<16x128xf32>
    %cst_17 = arith.constant dense<0.000000e+00> : vector<16x128xf32>
    %22 = tpu.matmul %1, %21, %cst_17 {dimension_numbers = #tpu.dot_dimension_numbers<[1], [0], [0], [1], [0, 0, 1, 1], [], []>} : vector<16x16xf32>, vector<16x128xf32>, vector<16x128xf32> -> vector<16x128xf32>
    %23 = arith.addf %22, %15 : vector<16x128xf32>
    %cst_18 = arith.constant dense<0.000000e+00> : vector<16x128xf32>
    %24 = tpu.matmul %1, %23, %cst_18 {dimension_numbers = #tpu.dot_dimension_numbers<[1], [0], [0], [1], [0, 0, 1, 1], [], []>} : vector<16x16xf32>, vector<16x128xf32>, vector<16x128xf32> -> vector<16x128xf32>
    %25 = arith.addf %24, %15 : vector<16x128xf32>
    %cst_19 = arith.constant dense<0.000000e+00> : vector<16x128xf32>
    %26 = tpu.matmul %1, %25, %cst_19 {dimension_numbers = #tpu.dot_dimension_numbers<[1], [0], [0], [1], [0, 0, 1, 1], [], []>} : vector<16x16xf32>, vector<16x128xf32>, vector<16x128xf32> -> vector<16x128xf32>
    %27 = arith.addf %26, %15 : vector<16x128xf32>
    %cst_20 = arith.constant dense<0.000000e+00> : vector<16x128xf32>
    %28 = tpu.matmul %1, %27, %cst_20 {dimension_numbers = #tpu.dot_dimension_numbers<[1], [0], [0], [1], [0, 0, 1, 1], [], []>} : vector<16x16xf32>, vector<16x128xf32>, vector<16x128xf32> -> vector<16x128xf32>
    %29 = arith.addf %28, %15 : vector<16x128xf32>
    %cst_21 = arith.constant dense<0.000000e+00> : vector<16x128xf32>
    %30 = tpu.matmul %1, %29, %cst_21 {dimension_numbers = #tpu.dot_dimension_numbers<[1], [0], [0], [1], [0, 0, 1, 1], [], []>} : vector<16x16xf32>, vector<16x128xf32>, vector<16x128xf32> -> vector<16x128xf32>
    %31 = arith.addf %30, %15 : vector<16x128xf32>
    %cst_22 = arith.constant dense<0.000000e+00> : vector<16x128xf32>
    %32 = tpu.matmul %1, %31, %cst_22 {dimension_numbers = #tpu.dot_dimension_numbers<[1], [0], [0], [1], [0, 0, 1, 1], [], []>} : vector<16x16xf32>, vector<16x128xf32>, vector<16x128xf32> -> vector<16x128xf32>
    %33 = arith.addf %32, %15 : vector<16x128xf32>
    %cst_23 = arith.constant dense<0.000000e+00> : vector<16x128xf32>
    %34 = tpu.matmul %1, %33, %cst_23 {dimension_numbers = #tpu.dot_dimension_numbers<[1], [0], [0], [1], [0, 0, 1, 1], [], []>} : vector<16x16xf32>, vector<16x128xf32>, vector<16x128xf32> -> vector<16x128xf32>
    %35 = arith.addf %34, %15 : vector<16x128xf32>
    %c0_24 = arith.constant 0 : index
    %c0_25 = arith.constant 0 : index
    %36 = vector.load %arg6[%c0_24, %c0_25] : memref<8x11xf32, #tpu.memory_space<vmem>>, vector<8x11xf32>
    %cst_26 = arith.constant dense<0.000000e+00> : vector<16x11xf32>
    %37 = tpu.matmul %0, %36, %cst_26 {dimension_numbers = #tpu.dot_dimension_numbers<[1], [0], [0], [1], [0, 0, 1, 1], [], []>} : vector<16x8xf32>, vector<8x11xf32>, vector<16x11xf32> -> vector<16x11xf32>
    %c0_27 = arith.constant 0 : index
    %c0_28 = arith.constant 0 : index
    %38 = vector.load %arg7[%c0_27, %c0_28] : memref<1x11xf32, #tpu.memory_space<vmem>>, vector<1x11xf32>
    %39 = vector.broadcast %38 : vector<1x11xf32> to vector<16x11xf32>
    %40 = arith.addf %37, %39 : vector<16x11xf32>
    %c0_29 = arith.constant 0 : index
    %c0_30 = arith.constant 0 : index
    %41 = vector.load %arg8[%c0_29, %c0_30] : memref<11x128xf32, #tpu.memory_space<vmem>>, vector<11x128xf32>
    %cst_31 = arith.constant 0.000000e+00 : f32
    %42 = vector.broadcast %cst_31 : f32 to vector<16x128xf32>
    %c0_32 = arith.constant 0 : index
    %43 = memref.load %arg9[%c0_32] : memref<11xf32, #tpu.memory_space<smem>>
    %44 = vector.broadcast %43 : f32 to vector<16x128xf32>
    %45 = arith.mulf %35, %44 : vector<16x128xf32>
    %46 = vector.extract_strided_slice %41 {offsets = [0, 0], sizes = [1, 128], strides = [1, 1]} : vector<11x128xf32> to vector<1x128xf32>
    %47 = vector.broadcast %46 : vector<1x128xf32> to vector<16x128xf32>
    %48 = arith.addf %45, %47 : vector<16x128xf32>
    %49 = vector.extract_strided_slice %40 {offsets = [0, 0], sizes = [16, 1], strides = [1, 1]} : vector<16x11xf32> to vector<16x1xf32>
    %50 = vector.broadcast %49 : vector<16x1xf32> to vector<16x128xf32>
    %51 = arith.addf %48, %50 : vector<16x128xf32>
    %cst_33 = arith.constant 0.000000e+00 : f32
    %52 = vector.broadcast %cst_33 : f32 to vector<16x128xf32>
    %53 = arith.maximumf %51, %52 : vector<16x128xf32>
    %c0_34 = arith.constant 0 : index
    %54 = memref.load %arg10[%c0_34] : memref<11xf32, #tpu.memory_space<smem>>
    %55 = vector.broadcast %54 : f32 to vector<16x128xf32>
    %56 = arith.mulf %53, %55 : vector<16x128xf32>
    %57 = arith.addf %42, %56 : vector<16x128xf32>
    %c1 = arith.constant 1 : index
    %58 = memref.load %arg9[%c1] : memref<11xf32, #tpu.memory_space<smem>>
    %59 = vector.broadcast %58 : f32 to vector<16x128xf32>
    %60 = arith.mulf %35, %59 : vector<16x128xf32>
    %61 = vector.extract_strided_slice %41 {offsets = [1, 0], sizes = [1, 128], strides = [1, 1]} : vector<11x128xf32> to vector<1x128xf32>
    %62 = vector.broadcast %61 : vector<1x128xf32> to vector<16x128xf32>
    %63 = arith.addf %60, %62 : vector<16x128xf32>
    %64 = vector.extract_strided_slice %40 {offsets = [0, 1], sizes = [16, 1], strides = [1, 1]} : vector<16x11xf32> to vector<16x1xf32>
    %65 = vector.broadcast %64 : vector<16x1xf32> to vector<16x128xf32>
    %66 = arith.addf %63, %65 : vector<16x128xf32>
    %cst_35 = arith.constant 0.000000e+00 : f32
    %67 = vector.broadcast %cst_35 : f32 to vector<16x128xf32>
    %68 = arith.maximumf %66, %67 : vector<16x128xf32>
    %c1_36 = arith.constant 1 : index
    %69 = memref.load %arg10[%c1_36] : memref<11xf32, #tpu.memory_space<smem>>
    %70 = vector.broadcast %69 : f32 to vector<16x128xf32>
    %71 = arith.mulf %68, %70 : vector<16x128xf32>
    %72 = arith.addf %57, %71 : vector<16x128xf32>
    %c2 = arith.constant 2 : index
    %73 = memref.load %arg9[%c2] : memref<11xf32, #tpu.memory_space<smem>>
    %74 = vector.broadcast %73 : f32 to vector<16x128xf32>
    %75 = arith.mulf %35, %74 : vector<16x128xf32>
    %76 = vector.extract_strided_slice %41 {offsets = [2, 0], sizes = [1, 128], strides = [1, 1]} : vector<11x128xf32> to vector<1x128xf32>
    %77 = vector.broadcast %76 : vector<1x128xf32> to vector<16x128xf32>
    %78 = arith.addf %75, %77 : vector<16x128xf32>
    %79 = vector.extract_strided_slice %40 {offsets = [0, 2], sizes = [16, 1], strides = [1, 1]} : vector<16x11xf32> to vector<16x1xf32>
    %80 = vector.broadcast %79 : vector<16x1xf32> to vector<16x128xf32>
    %81 = arith.addf %78, %80 : vector<16x128xf32>
    %cst_37 = arith.constant 0.000000e+00 : f32
    %82 = vector.broadcast %cst_37 : f32 to vector<16x128xf32>
    %83 = arith.maximumf %81, %82 : vector<16x128xf32>
    %c2_38 = arith.constant 2 : index
    %84 = memref.load %arg10[%c2_38] : memref<11xf32, #tpu.memory_space<smem>>
    %85 = vector.broadcast %84 : f32 to vector<16x128xf32>
    %86 = arith.mulf %83, %85 : vector<16x128xf32>
    %87 = arith.addf %72, %86 : vector<16x128xf32>
    %c3 = arith.constant 3 : index
    %88 = memref.load %arg9[%c3] : memref<11xf32, #tpu.memory_space<smem>>
    %89 = vector.broadcast %88 : f32 to vector<16x128xf32>
    %90 = arith.mulf %35, %89 : vector<16x128xf32>
    %91 = vector.extract_strided_slice %41 {offsets = [3, 0], sizes = [1, 128], strides = [1, 1]} : vector<11x128xf32> to vector<1x128xf32>
    %92 = vector.broadcast %91 : vector<1x128xf32> to vector<16x128xf32>
    %93 = arith.addf %90, %92 : vector<16x128xf32>
    %94 = vector.extract_strided_slice %40 {offsets = [0, 3], sizes = [16, 1], strides = [1, 1]} : vector<16x11xf32> to vector<16x1xf32>
    %95 = vector.broadcast %94 : vector<16x1xf32> to vector<16x128xf32>
    %96 = arith.addf %93, %95 : vector<16x128xf32>
    %cst_39 = arith.constant 0.000000e+00 : f32
    %97 = vector.broadcast %cst_39 : f32 to vector<16x128xf32>
    %98 = arith.maximumf %96, %97 : vector<16x128xf32>
    %c3_40 = arith.constant 3 : index
    %99 = memref.load %arg10[%c3_40] : memref<11xf32, #tpu.memory_space<smem>>
    %100 = vector.broadcast %99 : f32 to vector<16x128xf32>
    %101 = arith.mulf %98, %100 : vector<16x128xf32>
    %102 = arith.addf %87, %101 : vector<16x128xf32>
    %c4 = arith.constant 4 : index
    %103 = memref.load %arg9[%c4] : memref<11xf32, #tpu.memory_space<smem>>
    %104 = vector.broadcast %103 : f32 to vector<16x128xf32>
    %105 = arith.mulf %35, %104 : vector<16x128xf32>
    %106 = vector.extract_strided_slice %41 {offsets = [4, 0], sizes = [1, 128], strides = [1, 1]} : vector<11x128xf32> to vector<1x128xf32>
    %107 = vector.broadcast %106 : vector<1x128xf32> to vector<16x128xf32>
    %108 = arith.addf %105, %107 : vector<16x128xf32>
    %109 = vector.extract_strided_slice %40 {offsets = [0, 4], sizes = [16, 1], strides = [1, 1]} : vector<16x11xf32> to vector<16x1xf32>
    %110 = vector.broadcast %109 : vector<16x1xf32> to vector<16x128xf32>
    %111 = arith.addf %108, %110 : vector<16x128xf32>
    %cst_41 = arith.constant 0.000000e+00 : f32
    %112 = vector.broadcast %cst_41 : f32 to vector<16x128xf32>
    %113 = arith.maximumf %111, %112 : vector<16x128xf32>
    %c4_42 = arith.constant 4 : index
    %114 = memref.load %arg10[%c4_42] : memref<11xf32, #tpu.memory_space<smem>>
    %115 = vector.broadcast %114 : f32 to vector<16x128xf32>
    %116 = arith.mulf %113, %115 : vector<16x128xf32>
    %117 = arith.addf %102, %116 : vector<16x128xf32>
    %c5 = arith.constant 5 : index
    %118 = memref.load %arg9[%c5] : memref<11xf32, #tpu.memory_space<smem>>
    %119 = vector.broadcast %118 : f32 to vector<16x128xf32>
    %120 = arith.mulf %35, %119 : vector<16x128xf32>
    %121 = vector.extract_strided_slice %41 {offsets = [5, 0], sizes = [1, 128], strides = [1, 1]} : vector<11x128xf32> to vector<1x128xf32>
    %122 = vector.broadcast %121 : vector<1x128xf32> to vector<16x128xf32>
    %123 = arith.addf %120, %122 : vector<16x128xf32>
    %124 = vector.extract_strided_slice %40 {offsets = [0, 5], sizes = [16, 1], strides = [1, 1]} : vector<16x11xf32> to vector<16x1xf32>
    %125 = vector.broadcast %124 : vector<16x1xf32> to vector<16x128xf32>
    %126 = arith.addf %123, %125 : vector<16x128xf32>
    %cst_43 = arith.constant 0.000000e+00 : f32
    %127 = vector.broadcast %cst_43 : f32 to vector<16x128xf32>
    %128 = arith.maximumf %126, %127 : vector<16x128xf32>
    %c5_44 = arith.constant 5 : index
    %129 = memref.load %arg10[%c5_44] : memref<11xf32, #tpu.memory_space<smem>>
    %130 = vector.broadcast %129 : f32 to vector<16x128xf32>
    %131 = arith.mulf %128, %130 : vector<16x128xf32>
    %132 = arith.addf %117, %131 : vector<16x128xf32>
    %c6 = arith.constant 6 : index
    %133 = memref.load %arg9[%c6] : memref<11xf32, #tpu.memory_space<smem>>
    %134 = vector.broadcast %133 : f32 to vector<16x128xf32>
    %135 = arith.mulf %35, %134 : vector<16x128xf32>
    %136 = vector.extract_strided_slice %41 {offsets = [6, 0], sizes = [1, 128], strides = [1, 1]} : vector<11x128xf32> to vector<1x128xf32>
    %137 = vector.broadcast %136 : vector<1x128xf32> to vector<16x128xf32>
    %138 = arith.addf %135, %137 : vector<16x128xf32>
    %139 = vector.extract_strided_slice %40 {offsets = [0, 6], sizes = [16, 1], strides = [1, 1]} : vector<16x11xf32> to vector<16x1xf32>
    %140 = vector.broadcast %139 : vector<16x1xf32> to vector<16x128xf32>
    %141 = arith.addf %138, %140 : vector<16x128xf32>
    %cst_45 = arith.constant 0.000000e+00 : f32
    %142 = vector.broadcast %cst_45 : f32 to vector<16x128xf32>
    %143 = arith.maximumf %141, %142 : vector<16x128xf32>
    %c6_46 = arith.constant 6 : index
    %144 = memref.load %arg10[%c6_46] : memref<11xf32, #tpu.memory_space<smem>>
    %145 = vector.broadcast %144 : f32 to vector<16x128xf32>
    %146 = arith.mulf %143, %145 : vector<16x128xf32>
    %147 = arith.addf %132, %146 : vector<16x128xf32>
    %c7 = arith.constant 7 : index
    %148 = memref.load %arg9[%c7] : memref<11xf32, #tpu.memory_space<smem>>
    %149 = vector.broadcast %148 : f32 to vector<16x128xf32>
    %150 = arith.mulf %35, %149 : vector<16x128xf32>
    %151 = vector.extract_strided_slice %41 {offsets = [7, 0], sizes = [1, 128], strides = [1, 1]} : vector<11x128xf32> to vector<1x128xf32>
    %152 = vector.broadcast %151 : vector<1x128xf32> to vector<16x128xf32>
    %153 = arith.addf %150, %152 : vector<16x128xf32>
    %154 = vector.extract_strided_slice %40 {offsets = [0, 7], sizes = [16, 1], strides = [1, 1]} : vector<16x11xf32> to vector<16x1xf32>
    %155 = vector.broadcast %154 : vector<16x1xf32> to vector<16x128xf32>
    %156 = arith.addf %153, %155 : vector<16x128xf32>
    %cst_47 = arith.constant 0.000000e+00 : f32
    %157 = vector.broadcast %cst_47 : f32 to vector<16x128xf32>
    %158 = arith.maximumf %156, %157 : vector<16x128xf32>
    %c7_48 = arith.constant 7 : index
    %159 = memref.load %arg10[%c7_48] : memref<11xf32, #tpu.memory_space<smem>>
    %160 = vector.broadcast %159 : f32 to vector<16x128xf32>
    %161 = arith.mulf %158, %160 : vector<16x128xf32>
    %162 = arith.addf %147, %161 : vector<16x128xf32>
    %c8 = arith.constant 8 : index
    %163 = memref.load %arg9[%c8] : memref<11xf32, #tpu.memory_space<smem>>
    %164 = vector.broadcast %163 : f32 to vector<16x128xf32>
    %165 = arith.mulf %35, %164 : vector<16x128xf32>
    %166 = vector.extract_strided_slice %41 {offsets = [8, 0], sizes = [1, 128], strides = [1, 1]} : vector<11x128xf32> to vector<1x128xf32>
    %167 = vector.broadcast %166 : vector<1x128xf32> to vector<16x128xf32>
    %168 = arith.addf %165, %167 : vector<16x128xf32>
    %169 = vector.extract_strided_slice %40 {offsets = [0, 8], sizes = [16, 1], strides = [1, 1]} : vector<16x11xf32> to vector<16x1xf32>
    %170 = vector.broadcast %169 : vector<16x1xf32> to vector<16x128xf32>
    %171 = arith.addf %168, %170 : vector<16x128xf32>
    %cst_49 = arith.constant 0.000000e+00 : f32
    %172 = vector.broadcast %cst_49 : f32 to vector<16x128xf32>
    %173 = arith.maximumf %171, %172 : vector<16x128xf32>
    %c8_50 = arith.constant 8 : index
    %174 = memref.load %arg10[%c8_50] : memref<11xf32, #tpu.memory_space<smem>>
    %175 = vector.broadcast %174 : f32 to vector<16x128xf32>
    %176 = arith.mulf %173, %175 : vector<16x128xf32>
    %177 = arith.addf %162, %176 : vector<16x128xf32>
    %c9 = arith.constant 9 : index
    %178 = memref.load %arg9[%c9] : memref<11xf32, #tpu.memory_space<smem>>
    %179 = vector.broadcast %178 : f32 to vector<16x128xf32>
    %180 = arith.mulf %35, %179 : vector<16x128xf32>
    %181 = vector.extract_strided_slice %41 {offsets = [9, 0], sizes = [1, 128], strides = [1, 1]} : vector<11x128xf32> to vector<1x128xf32>
    %182 = vector.broadcast %181 : vector<1x128xf32> to vector<16x128xf32>
    %183 = arith.addf %180, %182 : vector<16x128xf32>
    %184 = vector.extract_strided_slice %40 {offsets = [0, 9], sizes = [16, 1], strides = [1, 1]} : vector<16x11xf32> to vector<16x1xf32>
    %185 = vector.broadcast %184 : vector<16x1xf32> to vector<16x128xf32>
    %186 = arith.addf %183, %185 : vector<16x128xf32>
    %cst_51 = arith.constant 0.000000e+00 : f32
    %187 = vector.broadcast %cst_51 : f32 to vector<16x128xf32>
    %188 = arith.maximumf %186, %187 : vector<16x128xf32>
    %c9_52 = arith.constant 9 : index
    %189 = memref.load %arg10[%c9_52] : memref<11xf32, #tpu.memory_space<smem>>
    %190 = vector.broadcast %189 : f32 to vector<16x128xf32>
    %191 = arith.mulf %188, %190 : vector<16x128xf32>
    %192 = arith.addf %177, %191 : vector<16x128xf32>
    %c10 = arith.constant 10 : index
    %193 = memref.load %arg9[%c10] : memref<11xf32, #tpu.memory_space<smem>>
    %194 = vector.broadcast %193 : f32 to vector<16x128xf32>
    %195 = arith.mulf %35, %194 : vector<16x128xf32>
    %196 = vector.extract_strided_slice %41 {offsets = [10, 0], sizes = [1, 128], strides = [1, 1]} : vector<11x128xf32> to vector<1x128xf32>
    %197 = vector.broadcast %196 : vector<1x128xf32> to vector<16x128xf32>
    %198 = arith.addf %195, %197 : vector<16x128xf32>
    %199 = vector.extract_strided_slice %40 {offsets = [0, 10], sizes = [16, 1], strides = [1, 1]} : vector<16x11xf32> to vector<16x1xf32>
    %200 = vector.broadcast %199 : vector<16x1xf32> to vector<16x128xf32>
    %201 = arith.addf %198, %200 : vector<16x128xf32>
    %cst_53 = arith.constant 0.000000e+00 : f32
    %202 = vector.broadcast %cst_53 : f32 to vector<16x128xf32>
    %203 = arith.maximumf %201, %202 : vector<16x128xf32>
    %c10_54 = arith.constant 10 : index
    %204 = memref.load %arg10[%c10_54] : memref<11xf32, #tpu.memory_space<smem>>
    %205 = vector.broadcast %204 : f32 to vector<16x128xf32>
    %206 = arith.mulf %203, %205 : vector<16x128xf32>
    %207 = arith.addf %192, %206 : vector<16x128xf32>
    %c0_55 = arith.constant 0 : index
    %208 = memref.load %arg11[%c0_55] : memref<1xf32, #tpu.memory_space<smem>>
    %209 = vector.broadcast %208 : f32 to vector<16x128xf32>
    %210 = arith.addf %207, %209 : vector<16x128xf32>
    %cst_56 = arith.constant 1.000000e-01 : f32
    %211 = vector.broadcast %cst_56 : f32 to vector<16x128xf32>
    %212 = arith.mulf %211, %210 : vector<16x128xf32>
    %cst_57 = arith.constant dense<0.000000e+00> : vector<16x128xf32>
    %213 = tpu.matmul %1, %210, %cst_57 {dimension_numbers = #tpu.dot_dimension_numbers<[1], [0], [0], [1], [0, 0, 1, 1], [], []>} : vector<16x16xf32>, vector<16x128xf32>, vector<16x128xf32> -> vector<16x128xf32>
    %214 = arith.addf %213, %212 : vector<16x128xf32>
    %cst_58 = arith.constant dense<0.000000e+00> : vector<16x128xf32>
    %215 = tpu.matmul %1, %214, %cst_58 {dimension_numbers = #tpu.dot_dimension_numbers<[1], [0], [0], [1], [0, 0, 1, 1], [], []>} : vector<16x16xf32>, vector<16x128xf32>, vector<16x128xf32> -> vector<16x128xf32>
    %216 = arith.addf %215, %212 : vector<16x128xf32>
    %cst_59 = arith.constant dense<0.000000e+00> : vector<16x128xf32>
    %217 = tpu.matmul %1, %216, %cst_59 {dimension_numbers = #tpu.dot_dimension_numbers<[1], [0], [0], [1], [0, 0, 1, 1], [], []>} : vector<16x16xf32>, vector<16x128xf32>, vector<16x128xf32> -> vector<16x128xf32>
    %218 = arith.addf %217, %212 : vector<16x128xf32>
    %cst_60 = arith.constant dense<0.000000e+00> : vector<16x128xf32>
    %219 = tpu.matmul %1, %218, %cst_60 {dimension_numbers = #tpu.dot_dimension_numbers<[1], [0], [0], [1], [0, 0, 1, 1], [], []>} : vector<16x16xf32>, vector<16x128xf32>, vector<16x128xf32> -> vector<16x128xf32>
    %220 = arith.addf %219, %212 : vector<16x128xf32>
    %cst_61 = arith.constant dense<0.000000e+00> : vector<16x128xf32>
    %221 = tpu.matmul %1, %220, %cst_61 {dimension_numbers = #tpu.dot_dimension_numbers<[1], [0], [0], [1], [0, 0, 1, 1], [], []>} : vector<16x16xf32>, vector<16x128xf32>, vector<16x128xf32> -> vector<16x128xf32>
    %222 = arith.addf %221, %212 : vector<16x128xf32>
    %cst_62 = arith.constant dense<0.000000e+00> : vector<16x128xf32>
    %223 = tpu.matmul %1, %222, %cst_62 {dimension_numbers = #tpu.dot_dimension_numbers<[1], [0], [0], [1], [0, 0, 1, 1], [], []>} : vector<16x16xf32>, vector<16x128xf32>, vector<16x128xf32> -> vector<16x128xf32>
    %224 = arith.addf %223, %212 : vector<16x128xf32>
    %cst_63 = arith.constant dense<0.000000e+00> : vector<16x128xf32>
    %225 = tpu.matmul %1, %224, %cst_63 {dimension_numbers = #tpu.dot_dimension_numbers<[1], [0], [0], [1], [0, 0, 1, 1], [], []>} : vector<16x16xf32>, vector<16x128xf32>, vector<16x128xf32> -> vector<16x128xf32>
    %226 = arith.addf %225, %212 : vector<16x128xf32>
    %cst_64 = arith.constant dense<0.000000e+00> : vector<16x128xf32>
    %227 = tpu.matmul %1, %226, %cst_64 {dimension_numbers = #tpu.dot_dimension_numbers<[1], [0], [0], [1], [0, 0, 1, 1], [], []>} : vector<16x16xf32>, vector<16x128xf32>, vector<16x128xf32> -> vector<16x128xf32>
    %228 = arith.addf %227, %212 : vector<16x128xf32>
    %cst_65 = arith.constant dense<0.000000e+00> : vector<16x128xf32>
    %229 = tpu.matmul %1, %228, %cst_65 {dimension_numbers = #tpu.dot_dimension_numbers<[1], [0], [0], [1], [0, 0, 1, 1], [], []>} : vector<16x16xf32>, vector<16x128xf32>, vector<16x128xf32> -> vector<16x128xf32>
    %230 = arith.addf %229, %212 : vector<16x128xf32>
    %cst_66 = arith.constant dense<0.000000e+00> : vector<16x128xf32>
    %231 = tpu.matmul %1, %230, %cst_66 {dimension_numbers = #tpu.dot_dimension_numbers<[1], [0], [0], [1], [0, 0, 1, 1], [], []>} : vector<16x16xf32>, vector<16x128xf32>, vector<16x128xf32> -> vector<16x128xf32>
    %232 = arith.addf %231, %212 : vector<16x128xf32>
    %c0_67 = arith.constant 0 : index
    %c0_68 = arith.constant 0 : index
    %233 = vector.load %arg12[%c0_67, %c0_68] : memref<16x128xf32, #tpu.memory_space<vmem>>, vector<16x128xf32>
    tpu.vector_store %arg12[%c0_67, %c0_68], %232 {strides = array<i32>} : memref<16x128xf32, #tpu.memory_space<vmem>>, vector<16x128xf32>,
    return
  }
}

</mosaic_0001>

<llo_original>
// kernel: tpu_custom_call.1
$region0: #{tpu_custom_call.1}
  #allocation0 [shape = 'u32[]', space=smem, size = 0x4, offset = 0x4, fixed_abs, tag = 'smem constant byte address 0x4 - core index']
  #allocation1 [shape = 'u32[144,128]{1,0:T(1,128)}', space=vmem, size = 0x12000, scoped, tag = 'internal scratch']
  #allocation2 [shape = 'f32[1]{0:T(128)S(6)}', space=smem, size = 0x200, scoped, tag = 'scoped memory for tpu_custom_call.1']
  %s0 = inlined_call_operand.vmem [shape: f32[16,8], index: 0, kind: input, shape index: {}]
  %s1 = inlined_call_operand.hbm [shape: f32[16,16], index: 1, kind: input, shape index: {}]
  %s2 = inlined_call_operand.hbm [shape: f32[8,32], index: 2, kind: input, shape index: {}]
  %s3 = inlined_call_operand.vmem [shape: f32[1,32], index: 3, kind: input, shape index: {}]
  %s4 = inlined_call_operand.vmem [shape: f32[32,128], index: 4, kind: input, shape index: {}]
  %s5 = inlined_call_operand.vmem [shape: f32[1,128], index: 5, kind: input, shape index: {}]
  %s6 = inlined_call_operand.hbm [shape: f32[8,11], index: 6, kind: input, shape index: {}]
  %s7 = inlined_call_operand.vmem [shape: f32[1,11], index: 7, kind: input, shape index: {}]
  %s8 = inlined_call_operand.hbm [shape: f32[11,128], index: 8, kind: input, shape index: {}]
  %s9 = inlined_call_operand.vmem [shape: f32[11], index: 9, kind: input, shape index: {}]
  %s10 = inlined_call_operand.vmem [shape: f32[11], index: 10, kind: input, shape index: {}]
  %s11 = inlined_call_operand.<no memory space> [shape: f32[1], index: 11, kind: input, shape index: {}]
  %s12 = inlined_call_operand.hbm [shape: f32[16,128], index: 12, kind: output, shape index: {}]
  %s13 = sld [smem:[#allocation0]]
  $region82: #{tpu_custom_call.1} parent=0
    _
  %s15 = ssub.s32 1, %s13
  %s16 = scalar_select 0, %s15, %s13
  %17 = sst [smem:[#allocation2]] %s11
  $region1: #{tpu_custom_call.1} parent=0
    #allocation3 [shape = 'u8[8192]{0}', space=vmem, size = 0x2000, scoped, tag = 'input window, operand 1, single buffered']
    #allocation4 [shape = 's32[1]{0}', space=sflag, size = 0x4, scoped, tag = 'scoped memory for tpu_custom_call.1']
    #allocation5 [shape = 's32[1]{0}', space=sflag, size = 0x4, scoped, tag = 'scoped memory for tpu_custom_call.1']
    #allocation6 [shape = 's32[1]{0}', space=sflag, size = 0x4, scoped, tag = 'scoped memory for tpu_custom_call.1']
    #allocation7 [shape = 'u8[4096]{0}', space=vmem, size = 0x1000, scoped, tag = 'input window, operand 2, single buffered']
    #allocation8 [shape = 's32[1]{0}', space=sflag, size = 0x4, scoped, tag = 'scoped memory for tpu_custom_call.1']
    #allocation9 [shape = 'u8[4096]{0}', space=vmem, size = 0x1000, scoped, tag = 'input window, operand 6, single buffered']
    #allocation10 [shape = 'u8[8192]{0}', space=vmem, size = 0x2000, scoped, tag = 'input window, operand 8, single buffered']
    #allocation11 [shape = 's32[1]{0}', space=sflag, size = 0x4, scoped, tag = 'scoped memory for tpu_custom_call.1']
    #allocation12 [shape = 'u8[512]{0}', space=smem, size = 0x200, scoped, tag = 'input window, operand 9, single buffered']
    #allocation13 [shape = 'u8[512]{0}', space=smem, size = 0x200, scoped, tag = 'input window, operand 10, single buffered']
    #allocation14 [shape = 's32[1]{0}', space=sflag, size = 0x4, scoped, tag = 'scoped memory for tpu_custom_call.1']
    #allocation15 [shape = 'u8[8192]{0}', space=vmem, size = 0x2000, scoped, tag = 'output window, operand 0, single buffered']
    %18 = vsyncpa [#allocation4], 0
    %19 = vsyncpa [#allocation8], 0
    %20 = vsyncpa [#allocation11], 0
    %21 = vsyncpa [#allocation6], 0
    %22 = vsyncpa [#allocation14], 0
    %23 = vsyncpa [#allocation5], 0
    // Predicated region
    $region2: #{tpu_custom_call.1} parent=1 // pred_check
      _
    $region3: #{tpu_custom_call.1} parent=1 // pred_check_branch
      %25 = sbr.rel (0) target = $region5
    $region4: #{tpu_custom_call.1} parent=1 // pred_region
      _
    $region5: #{tpu_custom_call.1} parent=1 // pred_fallthru
      _
    // Predicated region
    $region6: #{tpu_custom_call.1} parent=1 // pred_check
      _
    $region7: #{tpu_custom_call.1} parent=1 // pred_check_branch
      %27 = sbr.rel (0) target = $region9
    $region8: #{tpu_custom_call.1} parent=1 // pred_region
      %s29 = ssub.s32 256, 256
      %30 = vsyncadd [#allocation4], %s29
      %s31 = sshll.u32 [#allocation3], 4
      %s32 = int_to_ptr.vmem [resolvable:$true] %s31
      %37 = dma.hbm_to_vmem [thread:$0]  %s1, 256, %s32, [#allocation4], 128, 128, 8
    $region9: #{tpu_custom_call.1} parent=1 // pred_fallthru
      _
    // Predicated region
    $region10: #{tpu_custom_call.1} parent=1 // pred_check
      _
    $region11: #{tpu_custom_call.1} parent=1 // pred_check_branch
      %39 = sbr.rel (0) target = $region13
    $region12: #{tpu_custom_call.1} parent=1 // pred_region
      %s41 = ssub.s32 128, 128
      %42 = vsyncadd [#allocation8], %s41
      %s44 = sshll.u32 [#allocation7], 4
      %s45 = int_to_ptr.vmem [resolvable:$true] %s44
      %47 = dma.hbm_to_vmem [thread:$0]  %s2, 128, %s45, [#allocation8]
    $region13: #{tpu_custom_call.1} parent=1 // pred_fallthru
      _
    // Predicated region
    $region14: #{tpu_custom_call.1} parent=1 // pred_check
      _
    $region15: #{tpu_custom_call.1} parent=1 // pred_check_branch
      %49 = sbr.rel (0) target = $region17
    $region16: #{tpu_custom_call.1} parent=1 // pred_region
      _
    $region17: #{tpu_custom_call.1} parent=1 // pred_fallthru
      _
    // Predicated region
    $region18: #{tpu_custom_call.1} parent=1 // pred_check
      _
    $region19: #{tpu_custom_call.1} parent=1 // pred_check_branch
      %51 = sbr.rel (0) target = $region21
    $region20: #{tpu_custom_call.1} parent=1 // pred_region
      _
    $region21: #{tpu_custom_call.1} parent=1 // pred_fallthru
      _
    // Predicated region
    $region22: #{tpu_custom_call.1} parent=1 // pred_check
      _
    $region23: #{tpu_custom_call.1} parent=1 // pred_check_branch
      %53 = sbr.rel (0) target = $region25
    $region24: #{tpu_custom_call.1} parent=1 // pred_region
      _
    $region25: #{tpu_custom_call.1} parent=1 // pred_fallthru
      _
    // Predicated region
    $region26: #{tpu_custom_call.1} parent=1 // pred_check
      _
    $region27: #{tpu_custom_call.1} parent=1 // pred_check_branch
      %55 = sbr.rel (0) target = $region29
    $region28: #{tpu_custom_call.1} parent=1 // pred_region
      %s57 = ssub.s32 128, 128
      %58 = vsyncadd [#allocation8], %s57
      %s60 = sshll.u32 [#allocation9], 4
      %s61 = int_to_ptr.vmem [resolvable:$true] %s60
      %63 = dma.hbm_to_vmem [thread:$0]  %s6, 128, %s61, [#allocation8]
    $region29: #{tpu_custom_call.1} parent=1 // pred_fallthru
      _
    // Predicated region
    $region30: #{tpu_custom_call.1} parent=1 // pred_check
      _
    $region31: #{tpu_custom_call.1} parent=1 // pred_check_branch
      %65 = sbr.rel (0) target = $region33
    $region32: #{tpu_custom_call.1} parent=1 // pred_region
      _
    $region33: #{tpu_custom_call.1} parent=1 // pred_fallthru
      _
    // Predicated region
    $region34: #{tpu_custom_call.1} parent=1 // pred_check
      _
    $region35: #{tpu_custom_call.1} parent=1 // pred_check_branch
      %67 = sbr.rel (0) target = $region37
    $region36: #{tpu_custom_call.1} parent=1 // pred_region
      %s69 = ssub.s32 256, 256
      %70 = vsyncadd [#allocation11], %s69
      %s71 = sshll.u32 [#allocation10], 4
      %s72 = int_to_ptr.vmem [resolvable:$true] %s71
      %77 = dma.hbm_to_vmem [thread:$0]  %s8, 256, %s72, [#allocation11], 128, 128, 8
    $region37: #{tpu_custom_call.1} parent=1 // pred_fallthru
      _
    // Predicated region
    $region38: #{tpu_custom_call.1} parent=1 // pred_check
      _
    $region39: #{tpu_custom_call.1} parent=1 // pred_check_branch
      %79 = sbr.rel (0) target = $region41
    $region40: #{tpu_custom_call.1} parent=1 // pred_region
      %s81 = ssub.s32 16, 16
      %82 = vsyncadd [#allocation6], %s81
      %s84 = sshll.u32 %s9, 4
      %s85 = int_to_ptr.vmem [resolvable:$true] %s84
      %87 = dma.vmem_to_smem %s85, 16, [#allocation12], [#allocation6]
    $region41: #{tpu_custom_call.1} parent=1 // pred_fallthru
      _
    // Predicated region
    $region42: #{tpu_custom_call.1} parent=1 // pred_check
      _
    $region43: #{tpu_custom_call.1} parent=1 // pred_check_branch
      %89 = sbr.rel (0) target = $region45
    $region44: #{tpu_custom_call.1} parent=1 // pred_region
      %s91 = ssub.s32 16, 16
      %92 = vsyncadd [#allocation14], %s91
      %s94 = sshll.u32 %s10, 4
      %s95 = int_to_ptr.vmem [resolvable:$true] %s94
      %97 = dma.vmem_to_smem %s95, 16, [#allocation13], [#allocation14]
    $region45: #{tpu_custom_call.1} parent=1 // pred_fallthru
      _
    // Predicated region
    $region46: #{tpu_custom_call.1} parent=1 // pred_check
      _
    $region47: #{tpu_custom_call.1} parent=1 // pred_check_branch
      %99 = sbr.rel (0) target = $region49
    $region48: #{tpu_custom_call.1} parent=1 // pred_region
      _
    $region49: #{tpu_custom_call.1} parent=1 // pred_fallthru
      _
    // Predicated region
    $region50: #{tpu_custom_call.1} parent=1 // pred_check
      _
    $region51: #{tpu_custom_call.1} parent=1 // pred_check_branch
      %101 = sbr.rel (0) target = $region53
    $region52: #{tpu_custom_call.1} parent=1 // pred_region
      %102 = dma.done [#allocation4], 256
    $region53: #{tpu_custom_call.1} parent=1 // pred_fallthru
      _
    // Predicated region
    $region54: #{tpu_custom_call.1} parent=1 // pred_check
      _
    $region55: #{tpu_custom_call.1} parent=1 // pred_check_branch
      %104 = sbr.rel (0) target = $region57
    $region56: #{tpu_custom_call.1} parent=1 // pred_region
      %105 = dma.done [#allocation8], 128
    $region57: #{tpu_custom_call.1} parent=1 // pred_fallthru
      _
    // Predicated region
    $region58: #{tpu_custom_call.1} parent=1 // pred_check
      _
    $region59: #{tpu_custom_call.1} parent=1 // pred_check_branch
      %107 = sbr.rel (0) target = $region61
    $region60: #{tpu_custom_call.1} parent=1 // pred_region
      %108 = dma.done [#allocation8], 128
    $region61: #{tpu_custom_call.1} parent=1 // pred_fallthru
      _
    // Predicated region
    $region62: #{tpu_custom_call.1} parent=1 // pred_check
      _
    $region63: #{tpu_custom_call.1} parent=1 // pred_check_branch
      %110 = sbr.rel (0) target = $region65
    $region64: #{tpu_custom_call.1} parent=1 // pred_region
      %111 = dma.done [#allocation11], 256
    $region65: #{tpu_custom_call.1} parent=1 // pred_fallthru
      _
    // Predicated region
    $region66: #{tpu_custom_call.1} parent=1 // pred_check
      _
    $region67: #{tpu_custom_call.1} parent=1 // pred_check_branch
      %113 = sbr.rel (0) target = $region69
    $region68: #{tpu_custom_call.1} parent=1 // pred_region
      %114 = dma.done [#allocation6], 16
    $region69: #{tpu_custom_call.1} parent=1 // pred_fallthru
      _
    // Predicated region
    $region70: #{tpu_custom_call.1} parent=1 // pred_check
      _
    $region71: #{tpu_custom_call.1} parent=1 // pred_check_branch
      %116 = sbr.rel (0) target = $region73
    $region72: #{tpu_custom_call.1} parent=1 // pred_region
      %117 = dma.done [#allocation14], 16
    $region73: #{tpu_custom_call.1} parent=1 // pred_fallthru
      _
    %118 = sfence
    %v119 = vld [vmem:[%s0] sm:$0xff]
    %v120 = vld [vmem:[%s0 + $0x8] sm:$0xff]
    %v121 = vld [vmem:[#allocation3] sm:$0xff]
    %v122 = vld [vmem:[#allocation3 + $0x8] sm:$0xff]
    %v123 = vld [vmem:[#allocation7] sm:$0xff]
    %v124 = vld [vmem:[%s3] sm:$0x1]
    %v126 = vlaneseq
    %v127 = vshrl.u32 %v126, 7
    %v128 = vsub.s32 0, %v127
    %v129 = vrot.slane %v124, %v128
    %vm131 = vcmask 64512
    %v133 = vsel %vm131, %v119, 0
    %v136 = vsel %vm131, %v120, 0
    %138 = vmatprep.subr.mxu0 0.0
    %139 = vmatpush1.msra.mxu0 0.0
    %140 = vmatprep.subr.mxu0 0.0
    %141 = vmatpush1.msra.mxu0 0.0
    %142 = vmatprep.subr.mxu0 0.0
    %143 = vmatpush1.msra.mxu0 0.0
    %144 = vmatprep.subr.mxu0 0.0
    %145 = vmatpush1.msra.mxu0 0.0
    %146 = vmatprep.subr.mxu0 0.0
    %147 = vmatpush1.msra.mxu0 0.0
    %148 = vmatprep.subr.mxu0 0.0
    %149 = vmatpush1.msra.mxu0 0.0
    %150 = vmatprep.subr.mxu0 0.0
    %151 = vmatpush1.msra.mxu0 0.0
    %152 = vmatprep.subr.mxu0 0.0
    %153 = vmatpush1.msra.mxu0 0.0
    %154 = vmatprep.subr.mxu0 0.0
    %155 = vmatpush1.msra.mxu0 0.0
    %156 = vmatprep.subr.mxu0 0.0
    %157 = vmatpush1.msra.mxu0 0.0
    %158 = vmatprep.subr.mxu0 0.0
    %159 = vmatpush1.msra.mxu0 0.0
    %160 = vmatprep.subr.mxu0 0.0
    %161 = vmatpush1.msra.mxu0 0.0
    %162 = vmatprep.subr.mxu0 0.0
    %163 = vmatpush1.msra.mxu0 0.0
    %164 = vmatprep.subr.mxu0 0.0
    %165 = vmatpush1.msra.mxu0 0.0
    %166 = vmatprep.subr.mxu0 0.0
    %167 = vmatpush1.msra.mxu0 0.0
    %168 = vmatprep.subr.mxu0 0.0
    %169 = vmatpush1.msra.mxu0 %v123
    %170 = vmatprep.subr.mxu0 0.0
    %171 = vmatpush2.msra.mxu0 0.0
    %172 = vmatprep.subr.mxu0 0.0
    %173 = vmatpush2.msra.mxu0 0.0
    %174 = vmatprep.subr.mxu0 0.0
    %175 = vmatpush2.msra.mxu0 0.0
    %176 = vmatprep.subr.mxu0 0.0
    %177 = vmatpush2.msra.mxu0 0.0
    %178 = vmatprep.subr.mxu0 0.0
    %179 = vmatpush2.msra.mxu0 0.0
    %180 = vmatprep.subr.mxu0 0.0
    %181 = vmatpush2.msra.mxu0 0.0
    %182 = vmatprep.subr.mxu0 0.0
    %183 = vmatpush2.msra.mxu0 0.0
    %184 = vmatprep.subr.mxu0 0.0
    %185 = vmatpush2.msra.mxu0 0.0
    %186 = vmatprep.subr.mxu0 0.0
    %187 = vmatpush2.msra.mxu0 0.0
    %188 = vmatprep.subr.mxu0 0.0
    %189 = vmatpush2.msra.mxu0 0.0
    %190 = vmatprep.subr.mxu0 0.0
    %191 = vmatpush2.msra.mxu0 0.0
    %192 = vmatprep.subr.mxu0 0.0
    %193 = vmatpush2.msra.mxu0 0.0
    %194 = vmatprep.subr.mxu0 0.0
    %195 = vmatpush2.msra.mxu0 0.0
    %196 = vmatprep.subr.mxu0 0.0
    %197 = vmatpush2.msra.mxu0 0.0
    %198 = vmatprep.subr.mxu0 0.0
    %199 = vmatpush2.msra.mxu0 0.0
    %200 = vmatprep.subr.mxu0 0.0
    %201 = vmatpush2.msra.mxu0 0.0
    %202 = vmatprep.mubr.f32.mxu0 0.0
    %203 = vmatmul.mubr.f32.gmra.mxu0 %v133
    %v204 = vpop.f32.mrf.mxu0
    %v205 = vadd.f32 %v129, %v204
    %v206 = vpop.f32.mrf.mxu0
    %207 = vmatprep.mubr.f32.mxu0 0.0
    %208 = vmatmul.mubr.f32.gmra.mxu0 %v136
    %v209 = vpop.f32.mrf.mxu0
    %v210 = vadd.f32 %v129, %v209
    %v211 = vpop.f32.mrf.mxu0
    %212 = vdwg.mxu0
    %v213 = vmax.f32 %v205, 0.0
    %v214 = vmax.f32 %v210, 0.0
    %v215 = vld [vmem:[%s4] sm:$0xff]
    %v216 = vld [vmem:[%s4 + $0x8] sm:$0xff]
    %v217 = vld [vmem:[%s4 + $0x10] sm:$0xff]
    %v218 = vld [vmem:[%s4 + $0x18] sm:$0xff]
    %v219 = vld [vmem:[%s5] sm:$0x1]
    %v221 = vlaneseq
    %v222 = vshrl.u32 %v221, 7
    %v223 = vsub.s32 0, %v222
    %v224 = vrot.slane %v219, %v223
    %vm226 = vcmask 261120
    %v228 = vsel %vm226, %v213, 0
    %v231 = vsel %vm226, %v214, 0
    %233 = vmatprep.subr.mxu0 0.0
    %234 = vmatpush1.msra.mxu0 0.0
    %235 = vmatprep.subr.mxu0 0.0
    %236 = vmatpush1.msra.mxu0 0.0
    %237 = vmatprep.subr.mxu0 0.0
    %238 = vmatpush1.msra.mxu0 0.0
    %239 = vmatprep.subr.mxu0 0.0
    %240 = vmatpush1.msra.mxu0 0.0
    %241 = vmatprep.subr.mxu0 0.0
    %242 = vmatpush1.msra.mxu0 0.0
    %243 = vmatprep.subr.mxu0 0.0
    %244 = vmatpush1.msra.mxu0 0.0
    %245 = vmatprep.subr.mxu0 0.0
    %246 = vmatpush1.msra.mxu0 0.0
    %247 = vmatprep.subr.mxu0 0.0
    %248 = vmatpush1.msra.mxu0 0.0
    %249 = vmatprep.subr.mxu0 0.0
    %250 = vmatpush1.msra.mxu0 0.0
    %251 = vmatprep.subr.mxu0 0.0
    %252 = vmatpush1.msra.mxu0 0.0
    %253 = vmatprep.subr.mxu0 0.0
    %254 = vmatpush1.msra.mxu0 0.0
    %255 = vmatprep.subr.mxu0 0.0
    %256 = vmatpush1.msra.mxu0 0.0
    %257 = vmatprep.subr.mxu0 0.0
    %258 = vmatpush1.msra.mxu0 %v218
    %259 = vmatprep.subr.mxu0 0.0
    %260 = vmatpush1.msra.mxu0 %v217
    %261 = vmatprep.subr.mxu0 0.0
    %262 = vmatpush1.msra.mxu0 %v216
    %263 = vmatprep.subr.mxu0 0.0
    %264 = vmatpush1.msra.mxu0 %v215
    %265 = vmatprep.subr.mxu0 0.0
    %266 = vmatpush2.msra.mxu0 0.0
    %267 = vmatprep.subr.mxu0 0.0
    %268 = vmatpush2.msra.mxu0 0.0
    %269 = vmatprep.subr.mxu0 0.0
    %270 = vmatpush2.msra.mxu0 0.0
    %271 = vmatprep.subr.mxu0 0.0
    %272 = vmatpush2.msra.mxu0 0.0
    %273 = vmatprep.subr.mxu0 0.0
    %274 = vmatpush2.msra.mxu0 0.0
    %275 = vmatprep.subr.mxu0 0.0
    %276 = vmatpush2.msra.mxu0 0.0
    %277 = vmatprep.subr.mxu0 0.0
    %278 = vmatpush2.msra.mxu0 0.0
    %279 = vmatprep.subr.mxu0 0.0
    %280 = vmatpush2.msra.mxu0 0.0
    %281 = vmatprep.subr.mxu0 0.0
    %282 = vmatpush2.msra.mxu0 0.0
    %283 = vmatprep.subr.mxu0 0.0
    %284 = vmatpush2.msra.mxu0 0.0
    %285 = vmatprep.subr.mxu0 0.0
    %286 = vmatpush2.msra.mxu0 0.0
    %287 = vmatprep.subr.mxu0 0.0
    %288 = vmatpush2.msra.mxu0 0.0
    %289 = vmatprep.subr.mxu0 0.0
    %290 = vmatpush2.msra.mxu0 0.0
    %291 = vmatprep.subr.mxu0 0.0
    %292 = vmatpush2.msra.mxu0 0.0
    %293 = vmatprep.subr.mxu0 0.0
    %294 = vmatpush2.msra.mxu0 0.0
    %295 = vmatprep.subr.mxu0 0.0
    %296 = vmatpush2.msra.mxu0 0.0
    %297 = vmatprep.mubr.f32.mxu0 0.0
    %298 = vmatmul.mubr.f32.gmra.mxu0 %v228
    %v299 = vpop.f32.mrf.mxu0
    %v300 = vadd.f32 %v224, %v299
    %v301 = vpop.f32.mrf.mxu0
    %302 = vmatprep.mubr.f32.mxu0 0.0
    %303 = vmatmul.mubr.f32.gmra.mxu0 %v231
    %v304 = vpop.f32.mrf.mxu0
    %v305 = vadd.f32 %v224, %v304
    %v306 = vpop.f32.mrf.mxu0
    %307 = vdwg.mxu0
    %v308 = vmul.f32 %v300, 0.1
    %v309 = vmul.f32 %v305, 0.1
    %vm310 = vcmask 130048
    %v312 = vsel %vm310, %v121, 0
    %v315 = vsel %vm310, %v122, 0
    %317 = vmatprep.subr.mxu0 0.0
    %318 = vmatpush1.msra.mxu0 0.0
    %319 = vmatprep.subr.mxu0 0.0
    %320 = vmatpush1.msra.mxu0 0.0
    %321 = vmatprep.subr.mxu0 0.0
    %322 = vmatpush1.msra.mxu0 0.0
    %323 = vmatprep.subr.mxu0 0.0
    %324 = vmatpush1.msra.mxu0 0.0
    %325 = vmatprep.subr.mxu0 0.0
    %326 = vmatpush1.msra.mxu0 0.0
    %327 = vmatprep.subr.mxu0 0.0
    %328 = vmatpush1.msra.mxu0 0.0
    %329 = vmatprep.subr.mxu0 0.0
    %330 = vmatpush1.msra.mxu0 0.0
    %331 = vmatprep.subr.mxu0 0.0
    %332 = vmatpush1.msra.mxu0 0.0
    %333 = vmatprep.subr.mxu0 0.0
    %334 = vmatpush1.msra.mxu0 0.0
    %335 = vmatprep.subr.mxu0 0.0
    %336 = vmatpush1.msra.mxu0 0.0
    %337 = vmatprep.subr.mxu0 0.0
    %338 = vmatpush1.msra.mxu0 0.0
    %339 = vmatprep.subr.mxu0 0.0
    %340 = vmatpush1.msra.mxu0 0.0
    %341 = vmatprep.subr.mxu0 0.0
    %342 = vmatpush1.msra.mxu0 0.0
    %343 = vmatprep.subr.mxu0 0.0
    %344 = vmatpush1.msra.mxu0 0.0
    %345 = vmatprep.subr.mxu0 0.0
    %346 = vmatpush1.msra.mxu0 %v305
    %347 = vmatprep.subr.mxu0 0.0
    %348 = vmatpush1.msra.mxu0 %v300
    %349 = vmatprep.subr.mxu0 0.0
    %350 = vmatpush2.msra.mxu0 0.0
    %351 = vmatprep.subr.mxu0 0.0
    %352 = vmatpush2.msra.mxu0 0.0
    %353 = vmatprep.subr.mxu0 0.0
    %354 = vmatpush2.msra.mxu0 0.0
    %355 = vmatprep.subr.mxu0 0.0
    %356 = vmatpush2.msra.mxu0 0.0
    %357 = vmatprep.subr.mxu0 0.0
    %358 = vmatpush2.msra.mxu0 0.0
    %359 = vmatprep.subr.mxu0 0.0
    %360 = vmatpush2.msra.mxu0 0.0
    %361 = vmatprep.subr.mxu0 0.0
    %362 = vmatpush2.msra.mxu0 0.0
    %363 = vmatprep.subr.mxu0 0.0
    %364 = vmatpush2.msra.mxu0 0.0
    %365 = vmatprep.subr.mxu0 0.0
    %366 = vmatpush2.msra.mxu0 0.0
    %367 = vmatprep.subr.mxu0 0.0
    %368 = vmatpush2.msra.mxu0 0.0
    %369 = vmatprep.subr.mxu0 0.0
    %370 = vmatpush2.msra.mxu0 0.0
    %371 = vmatprep.subr.mxu0 0.0
    %372 = vmatpush2.msra.mxu0 0.0
    %373 = vmatprep.subr.mxu0 0.0
    %374 = vmatpush2.msra.mxu0 0.0
    %375 = vmatprep.subr.mxu0 0.0
    %376 = vmatpush2.msra.mxu0 0.0
    %377 = vmatprep.subr.mxu0 0.0
    %378 = vmatpush2.msra.mxu0 0.0
    %379 = vmatprep.subr.mxu0 0.0
    %380 = vmatpush2.msra.mxu0 0.0
    %381 = vmatprep.mubr.f32.mxu0 0.0
    %382 = vmatmul.mubr.f32.gmra.mxu0 %v312
    %v383 = vpop.f32.mrf.mxu0
    %v384 = vadd.f32 %v308, %v383
    %v385 = vpop.f32.mrf.mxu0
    %386 = vmatprep.mubr.f32.mxu0 0.0
    %387 = vmatmul.mubr.f32.gmra.mxu0 %v315
    %v388 = vpop.f32.mrf.mxu0
    %v389 = vadd.f32 %v309, %v388
    %v390 = vpop.f32.mrf.mxu0
    %391 = vdwg.mxu0
    %392 = vmatprep.subr.mxu0 0.0
    %393 = vmatpush1.msra.mxu0 0.0
    %394 = vmatprep.subr.mxu0 0.0
    %395 = vmatpush1.msra.mxu0 0.0
    %396 = vmatprep.subr.mxu0 0.0
    %397 = vmatpush1.msra.mxu0 0.0
    %398 = vmatprep.subr.mxu0 0.0
    %399 = vmatpush1.msra.mxu0 0.0
    %400 = vmatprep.subr.mxu0 0.0
    %401 = vmatpush1.msra.mxu0 0.0
    %402 = vmatprep.subr.mxu0 0.0
    %403 = vmatpush1.msra.mxu0 0.0
    %404 = vmatprep.subr.mxu0 0.0
    %405 = vmatpush1.msra.mxu0 0.0
    %406 = vmatprep.subr.mxu0 0.0
    %407 = vmatpush1.msra.mxu0 0.0
    %408 = vmatprep.subr.mxu0 0.0
    %409 = vmatpush1.msra.mxu0 0.0
    %410 = vmatprep.subr.mxu0 0.0
    %411 = vmatpush1.msra.mxu0 0.0
    %412 = vmatprep.subr.mxu0 0.0
    %413 = vmatpush1.msra.mxu0 0.0
    %414 = vmatprep.subr.mxu0 0.0
    %415 = vmatpush1.msra.mxu0 0.0
    %416 = vmatprep.subr.mxu0 0.0
    %417 = vmatpush1.msra.mxu0 0.0
    %418 = vmatprep.subr.mxu0 0.0
    %419 = vmatpush1.msra.mxu0 0.0
    %420 = vmatprep.subr.mxu0 0.0
    %421 = vmatpush1.msra.mxu0 %v389
    %422 = vmatprep.subr.mxu0 0.0
    %423 = vmatpush1.msra.mxu0 %v384
    %424 = vmatprep.subr.mxu0 0.0
    %425 = vmatpush2.msra.mxu0 0.0
    %426 = vmatprep.subr.mxu0 0.0
    %427 = vmatpush2.msra.mxu0 0.0
    %428 = vmatprep.subr.mxu0 0.0
    %429 = vmatpush2.msra.mxu0 0.0
    %430 = vmatprep.subr.mxu0 0.0
    %431 = vmatpush2.msra.mxu0 0.0
    %432 = vmatprep.subr.mxu0 0.0
    %433 = vmatpush2.msra.mxu0 0.0
    %434 = vmatprep.subr.mxu0 0.0
    %435 = vmatpush2.msra.mxu0 0.0
    %436 = vmatprep.subr.mxu0 0.0
    %437 = vmatpush2.msra.mxu0 0.0
    %438 = vmatprep.subr.mxu0 0.0
    %439 = vmatpush2.msra.mxu0 0.0
    %440 = vmatprep.subr.mxu0 0.0
    %441 = vmatpush2.msra.mxu0 0.0
    %442 = vmatprep.subr.mxu0 0.0
    %443 = vmatpush2.msra.mxu0 0.0
    %444 = vmatprep.subr.mxu0 0.0
    %445 = vmatpush2.msra.mxu0 0.0
    %446 = vmatprep.subr.mxu0 0.0
    %447 = vmatpush2.msra.mxu0 0.0
    %448 = vmatprep.subr.mxu0 0.0
    %449 = vmatpush2.msra.mxu0 0.0
    %450 = vmatprep.subr.mxu0 0.0
    %451 = vmatpush2.msra.mxu0 0.0
    %452 = vmatprep.subr.mxu0 0.0
    %453 = vmatpush2.msra.mxu0 0.0
    %454 = vmatprep.subr.mxu0 0.0
    %455 = vmatpush2.msra.mxu0 0.0
    %456 = vmatprep.mubr.f32.mxu0 0.0
    %457 = vmatmul.mubr.f32.gmra.mxu0 %v312
    %v458 = vpop.f32.mrf.mxu0
    %v459 = vadd.f32 %v308, %v458
    %v460 = vpop.f32.mrf.mxu0
    %461 = vmatprep.mubr.f32.mxu0 0.0
    %462 = vmatmul.mubr.f32.gmra.mxu0 %v315
    %v463 = vpop.f32.mrf.mxu0
    %v464 = vadd.f32 %v309, %v463
    %v465 = vpop.f32.mrf.mxu0
    %466 = vdwg.mxu0
    %467 = vmatprep.subr.mxu0 0.0
    %468 = vmatpush1.msra.mxu0 0.0
    %469 = vmatprep.subr.mxu0 0.0
    %470 = vmatpush1.msra.mxu0 0.0
    %471 = vmatprep.subr.mxu0 0.0
    %472 = vmatpush1.msra.mxu0 0.0
    %473 = vmatprep.subr.mxu0 0.0
    %474 = vmatpush1.msra.mxu0 0.0
    %475 = vmatprep.subr.mxu0 0.0
    %476 = vmatpush1.msra.mxu0 0.0
    %477 = vmatprep.subr.mxu0 0.0
    %478 = vmatpush1.msra.mxu0 0.0
    %479 = vmatprep.subr.mxu0 0.0
    %480 = vmatpush1.msra.mxu0 0.0
    %481 = vmatprep.subr.mxu0 0.0
    %482 = vmatpush1.msra.mxu0 0.0
    %483 = vmatprep.subr.mxu0 0.0
    %484 = vmatpush1.msra.mxu0 0.0
    %485 = vmatprep.subr.mxu0 0.0
    %486 = vmatpush1.msra.mxu0 0.0
    %487 = vmatprep.subr.mxu0 0.0
    %488 = vmatpush1.msra.mxu0 0.0
    %489 = vmatprep.subr.mxu0 0.0
    %490 = vmatpush1.msra.mxu0 0.0
    %491 = vmatprep.subr.mxu0 0.0
    %492 = vmatpush1.msra.mxu0 0.0
    %493 = vmatprep.subr.mxu0 0.0
    %494 = vmatpush1.msra.mxu0 0.0
    %495 = vmatprep.subr.mxu0 0.0
    %496 = vmatpush1.msra.mxu0 %v464
    %497 = vmatprep.subr.mxu0 0.0
    %498 = vmatpush1.msra.mxu0 %v459
    %499 = vmatprep.subr.mxu0 0.0
    %500 = vmatpush2.msra.mxu0 0.0
    %501 = vmatprep.subr.mxu0 0.0
    %502 = vmatpush2.msra.mxu0 0.0
    %503 = vmatprep.subr.mxu0 0.0
    %504 = vmatpush2.msra.mxu0 0.0
    %505 = vmatprep.subr.mxu0 0.0
    %506 = vmatpush2.msra.mxu0 0.0
    %507 = vmatprep.subr.mxu0 0.0
    %508 = vmatpush2.msra.mxu0 0.0
    %509 = vmatprep.subr.mxu0 0.0
    %510 = vmatpush2.msra.mxu0 0.0
    %511 = vmatprep.subr.mxu0 0.0
    %512 = vmatpush2.msra.mxu0 0.0
    %513 = vmatprep.subr.mxu0 0.0
    %514 = vmatpush2.msra.mxu0 0.0
    %515 = vmatprep.subr.mxu0 0.0
    %516 = vmatpush2.msra.mxu0 0.0
    %517 = vmatprep.subr.mxu0 0.0
    %518 = vmatpush2.msra.mxu0 0.0
    %519 = vmatprep.subr.mxu0 0.0
    %520 = vmatpush2.msra.mxu0 0.0
    %521 = vmatprep.subr.mxu0 0.0
    %522 = vmatpush2.msra.mxu0 0.0
    %523 = vmatprep.subr.mxu0 0.0
    %524 = vmatpush2.msra.mxu0 0.0
    %525 = vmatprep.subr.mxu0 0.0
    %526 = vmatpush2.msra.mxu0 0.0
    %527 = vmatprep.subr.mxu0 0.0
    %528 = vmatpush2.msra.mxu0 0.0
    %529 = vmatprep.subr.mxu0 0.0
    %530 = vmatpush2.msra.mxu0 0.0
    %531 = vmatprep.mubr.f32.mxu0 0.0
    %532 = vmatmul.mubr.f32.gmra.mxu0 %v312
    %v533 = vpop.f32.mrf.mxu0
    %v534 = vadd.f32 %v308, %v533
    %v535 = vpop.f32.mrf.mxu0
    %536 = vmatprep.mubr.f32.mxu0 0.0
    %537 = vmatmul.mubr.f32.gmra.mxu0 %v315
    %v538 = vpop.f32.mrf.mxu0
    %v539 = vadd.f32 %v309, %v538
    %v540 = vpop.f32.mrf.mxu0
    %541 = vdwg.mxu0
    %542 = vmatprep.subr.mxu0 0.0
    %543 = vmatpush1.msra.mxu0 0.0
    %544 = vmatprep.subr.mxu0 0.0
    %545 = vmatpush1.msra.mxu0 0.0
    %546 = vmatprep.subr.mxu0 0.0
    %547 = vmatpush1.msra.mxu0 0.0
    %548 = vmatprep.subr.mxu0 0.0
    %549 = vmatpush1.msra.mxu0 0.0
    %550 = vmatprep.subr.mxu0 0.0
    %551 = vmatpush1.msra.mxu0 0.0
    %552 = vmatprep.subr.mxu0 0.0
    %553 = vmatpush1.msra.mxu0 0.0
    %554 = vmatprep.subr.mxu0 0.0
    %555 = vmatpush1.msra.mxu0 0.0
    %556 = vmatprep.subr.mxu0 0.0
    %557 = vmatpush1.msra.mxu0 0.0
    %558 = vmatprep.subr.mxu0 0.0
    %559 = vmatpush1.msra.mxu0 0.0
    %560 = vmatprep.subr.mxu0 0.0
    %561 = vmatpush1.msra.mxu0 0.0
    %562 = vmatprep.subr.mxu0 0.0
    %563 = vmatpush1.msra.mxu0 0.0
    %564 = vmatprep.subr.mxu0 0.0
    %565 = vmatpush1.msra.mxu0 0.0
    %566 = vmatprep.subr.mxu0 0.0
    %567 = vmatpush1.msra.mxu0 0.0
    %568 = vmatprep.subr.mxu0 0.0
    %569 = vmatpush1.msra.mxu0 0.0
    %570 = vmatprep.subr.mxu0 0.0
    %571 = vmatpush1.msra.mxu0 %v539
    %572 = vmatprep.subr.mxu0 0.0
    %573 = vmatpush1.msra.mxu0 %v534
    %574 = vmatprep.subr.mxu0 0.0
    %575 = vmatpush2.msra.mxu0 0.0
    %576 = vmatprep.subr.mxu0 0.0
    %577 = vmatpush2.msra.mxu0 0.0
    %578 = vmatprep.subr.mxu0 0.0
    %579 = vmatpush2.msra.mxu0 0.0
    %580 = vmatprep.subr.mxu0 0.0
    %581 = vmatpush2.msra.mxu0 0.0
    %582 = vmatprep.subr.mxu0 0.0
    %583 = vmatpush2.msra.mxu0 0.0
    %584 = vmatprep.subr.mxu0 0.0
    %585 = vmatpush2.msra.mxu0 0.0
    %586 = vmatprep.subr.mxu0 0.0
    %587 = vmatpush2.msra.mxu0 0.0
    %588 = vmatprep.subr.mxu0 0.0
    %589 = vmatpush2.msra.mxu0 0.0
    %590 = vmatprep.subr.mxu0 0.0
    %591 = vmatpush2.msra.mxu0 0.0
    %592 = vmatprep.subr.mxu0 0.0
    %593 = vmatpush2.msra.mxu0 0.0
    %594 = vmatprep.subr.mxu0 0.0
    %595 = vmatpush2.msra.mxu0 0.0
    %596 = vmatprep.subr.mxu0 0.0
    %597 = vmatpush2.msra.mxu0 0.0
    %598 = vmatprep.subr.mxu0 0.0
    %599 = vmatpush2.msra.mxu0 0.0
    %600 = vmatprep.subr.mxu0 0.0
    %601 = vmatpush2.msra.mxu0 0.0
    %602 = vmatprep.subr.mxu0 0.0
    %603 = vmatpush2.msra.mxu0 0.0
    %604 = vmatprep.subr.mxu0 0.0
    %605 = vmatpush2.msra.mxu0 0.0
    %606 = vmatprep.mubr.f32.mxu0 0.0
    %607 = vmatmul.mubr.f32.gmra.mxu0 %v312
    %v608 = vpop.f32.mrf.mxu0
    %v609 = vadd.f32 %v308, %v608
    %v610 = vpop.f32.mrf.mxu0
    %611 = vmatprep.mubr.f32.mxu0 0.0
    %612 = vmatmul.mubr.f32.gmra.mxu0 %v315
    %v613 = vpop.f32.mrf.mxu0
    %v614 = vadd.f32 %v309, %v613
    %v615 = vpop.f32.mrf.mxu0
    %616 = vdwg.mxu0
    %617 = vmatprep.subr.mxu0 0.0
    %618 = vmatpush1.msra.mxu0 0.0
    %619 = vmatprep.subr.mxu0 0.0
    %620 = vmatpush1.msra.mxu0 0.0
    %621 = vmatprep.subr.mxu0 0.0
    %622 = vmatpush1.msra.mxu0 0.0
    %623 = vmatprep.subr.mxu0 0.0
    %624 = vmatpush1.msra.mxu0 0.0
    %625 = vmatprep.subr.mxu0 0.0
    %626 = vmatpush1.msra.mxu0 0.0
    %627 = vmatprep.subr.mxu0 0.0
    %628 = vmatpush1.msra.mxu0 0.0
    %629 = vmatprep.subr.mxu0 0.0
    %630 = vmatpush1.msra.mxu0 0.0
    %631 = vmatprep.subr.mxu0 0.0
    %632 = vmatpush1.msra.mxu0 0.0
    %633 = vmatprep.subr.mxu0 0.0
    %634 = vmatpush1.msra.mxu0 0.0
    %635 = vmatprep.subr.mxu0 0.0
    %636 = vmatpush1.msra.mxu0 0.0
    %637 = vmatprep.subr.mxu0 0.0
    %638 = vmatpush1.msra.mxu0 0.0
    %639 = vmatprep.subr.mxu0 0.0
    %640 = vmatpush1.msra.mxu0 0.0
    %641 = vmatprep.subr.mxu0 0.0
    %642 = vmatpush1.msra.mxu0 0.0
    %643 = vmatprep.subr.mxu0 0.0
    %644 = vmatpush1.msra.mxu0 0.0
    %645 = vmatprep.subr.mxu0 0.0
    %646 = vmatpush1.msra.mxu0 %v614
    %647 = vmatprep.subr.mxu0 0.0
    %648 = vmatpush1.msra.mxu0 %v609
    %649 = vmatprep.subr.mxu0 0.0
    %650 = vmatpush2.msra.mxu0 0.0
    %651 = vmatprep.subr.mxu0 0.0
    %652 = vmatpush2.msra.mxu0 0.0
    %653 = vmatprep.subr.mxu0 0.0
    %654 = vmatpush2.msra.mxu0 0.0
    %655 = vmatprep.subr.mxu0 0.0
    %656 = vmatpush2.msra.mxu0 0.0
    %657 = vmatprep.subr.mxu0 0.0
    %658 = vmatpush2.msra.mxu0 0.0
    %659 = vmatprep.subr.mxu0 0.0
    %660 = vmatpush2.msra.mxu0 0.0
    %661 = vmatprep.subr.mxu0 0.0
    %662 = vmatpush2.msra.mxu0 0.0
    %663 = vmatprep.subr.mxu0 0.0
    %664 = vmatpush2.msra.mxu0 0.0
    %665 = vmatprep.subr.mxu0 0.0
    %666 = vmatpush2.msra.mxu0 0.0
    %667 = vmatprep.subr.mxu0 0.0
    %668 = vmatpush2.msra.mxu0 0.0
    %669 = vmatprep.subr.mxu0 0.0
    %670 = vmatpush2.msra.mxu0 0.0
    %671 = vmatprep.subr.mxu0 0.0
    %672 = vmatpush2.msra.mxu0 0.0
    %673 = vmatprep.subr.mxu0 0.0
    %674 = vmatpush2.msra.mxu0 0.0
    %675 = vmatprep.subr.mxu0 0.0
    %676 = vmatpush2.msra.mxu0 0.0
    %677 = vmatprep.subr.mxu0 0.0
    %678 = vmatpush2.msra.mxu0 0.0
    %679 = vmatprep.subr.mxu0 0.0
    %680 = vmatpush2.msra.mxu0 0.0
    %681 = vmatprep.mubr.f32.mxu0 0.0
    %682 = vmatmul.mubr.f32.gmra.mxu0 %v312
    %v683 = vpop.f32.mrf.mxu0
    %v684 = vadd.f32 %v308, %v683
    %v685 = vpop.f32.mrf.mxu0
    %686 = vmatprep.mubr.f32.mxu0 0.0
    %687 = vmatmul.mubr.f32.gmra.mxu0 %v315
    %v688 = vpop.f32.mrf.mxu0
    %v689 = vadd.f32 %v309, %v688
    %v690 = vpop.f32.mrf.mxu0
    %691 = vdwg.mxu0
    %692 = vmatprep.subr.mxu0 0.0
    %693 = vmatpush1.msra.mxu0 0.0
    %694 = vmatprep.subr.mxu0 0.0
    %695 = vmatpush1.msra.mxu0 0.0
    %696 = vmatprep.subr.mxu0 0.0
    %697 = vmatpush1.msra.mxu0 0.0
    %698 = vmatprep.subr.mxu0 0.0
    %699 = vmatpush1.msra.mxu0 0.0
    %700 = vmatprep.subr.mxu0 0.0
    %701 = vmatpush1.msra.mxu0 0.0
    %702 = vmatprep.subr.mxu0 0.0
    %703 = vmatpush1.msra.mxu0 0.0
    %704 = vmatprep.subr.mxu0 0.0
    %705 = vmatpush1.msra.mxu0 0.0
    %706 = vmatprep.subr.mxu0 0.0
    %707 = vmatpush1.msra.mxu0 0.0
    %708 = vmatprep.subr.mxu0 0.0
    %709 = vmatpush1.msra.mxu0 0.0
    %710 = vmatprep.subr.mxu0 0.0
    %711 = vmatpush1.msra.mxu0 0.0
    %712 = vmatprep.subr.mxu0 0.0
    %713 = vmatpush1.msra.mxu0 0.0
    %714 = vmatprep.subr.mxu0 0.0
    %715 = vmatpush1.msra.mxu0 0.0
    %716 = vmatprep.subr.mxu0 0.0
    %717 = vmatpush1.msra.mxu0 0.0
    %718 = vmatprep.subr.mxu0 0.0
    %719 = vmatpush1.msra.mxu0 0.0
    %720 = vmatprep.subr.mxu0 0.0
    %721 = vmatpush1.msra.mxu0 %v689
    %722 = vmatprep.subr.mxu0 0.0
    %723 = vmatpush1.msra.mxu0 %v684
    %724 = vmatprep.subr.mxu0 0.0
    %725 = vmatpush2.msra.mxu0 0.0
    %726 = vmatprep.subr.mxu0 0.0
    %727 = vmatpush2.msra.mxu0 0.0
    %728 = vmatprep.subr.mxu0 0.0
    %729 = vmatpush2.msra.mxu0 0.0
    %730 = vmatprep.subr.mxu0 0.0
    %731 = vmatpush2.msra.mxu0 0.0
    %732 = vmatprep.subr.mxu0 0.0
    %733 = vmatpush2.msra.mxu0 0.0
    %734 = vmatprep.subr.mxu0 0.0
    %735 = vmatpush2.msra.mxu0 0.0
    %736 = vmatprep.subr.mxu0 0.0
    %737 = vmatpush2.msra.mxu0 0.0
    %738 = vmatprep.subr.mxu0 0.0
    %739 = vmatpush2.msra.mxu0 0.0
    %740 = vmatprep.subr.mxu0 0.0
    %741 = vmatpush2.msra.mxu0 0.0
    %742 = vmatprep.subr.mxu0 0.0
    %743 = vmatpush2.msra.mxu0 0.0
    %744 = vmatprep.subr.mxu0 0.0
    %745 = vmatpush2.msra.mxu0 0.0
    %746 = vmatprep.subr.mxu0 0.0
    %747 = vmatpush2.msra.mxu0 0.0
    %748 = vmatprep.subr.mxu0 0.0
    %749 = vmatpush2.msra.mxu0 0.0
    %750 = vmatprep.subr.mxu0 0.0
    %751 = vmatpush2.msra.mxu0 0.0
    %752 = vmatprep.subr.mxu0 0.0
    %753 = vmatpush2.msra.mxu0 0.0
    %754 = vmatprep.subr.mxu0 0.0
    %755 = vmatpush2.msra.mxu0 0.0
    %756 = vmatprep.mubr.f32.mxu0 0.0
    %757 = vmatmul.mubr.f32.gmra.mxu0 %v312
    %v758 = vpop.f32.mrf.mxu0
    %v759 = vadd.f32 %v308, %v758
    %v760 = vpop.f32.mrf.mxu0
    %761 = vmatprep.mubr.f32.mxu0 0.0
    %762 = vmatmul.mubr.f32.gmra.mxu0 %v315
    %v763 = vpop.f32.mrf.mxu0
    %v764 = vadd.f32 %v309, %v763
    %v765 = vpop.f32.mrf.mxu0
    %766 = vdwg.mxu0
    %767 = vmatprep.subr.mxu0 0.0
    %768 = vmatpush1.msra.mxu0 0.0
    %769 = vmatprep.subr.mxu0 0.0
    %770 = vmatpush1.msra.mxu0 0.0
    %771 = vmatprep.subr.mxu0 0.0
    %772 = vmatpush1.msra.mxu0 0.0
    %773 = vmatprep.subr.mxu0 0.0
    %774 = vmatpush1.msra.mxu0 0.0
    %775 = vmatprep.subr.mxu0 0.0
    %776 = vmatpush1.msra.mxu0 0.0
    %777 = vmatprep.subr.mxu0 0.0
    %778 = vmatpush1.msra.mxu0 0.0
    %779 = vmatprep.subr.mxu0 0.0
    %780 = vmatpush1.msra.mxu0 0.0
    %781 = vmatprep.subr.mxu0 0.0
    %782 = vmatpush1.msra.mxu0 0.0
    %783 = vmatprep.subr.mxu0 0.0
    %784 = vmatpush1.msra.mxu0 0.0
    %785 = vmatprep.subr.mxu0 0.0
    %786 = vmatpush1.msra.mxu0 0.0
    %787 = vmatprep.subr.mxu0 0.0
    %788 = vmatpush1.msra.mxu0 0.0
    %789 = vmatprep.subr.mxu0 0.0
    %790 = vmatpush1.msra.mxu0 0.0
    %791 = vmatprep.subr.mxu0 0.0
    %792 = vmatpush1.msra.mxu0 0.0
    %793 = vmatprep.subr.mxu0 0.0
    %794 = vmatpush1.msra.mxu0 0.0
    %795 = vmatprep.subr.mxu0 0.0
    %796 = vmatpush1.msra.mxu0 %v764
    %797 = vmatprep.subr.mxu0 0.0
    %798 = vmatpush1.msra.mxu0 %v759
    %799 = vmatprep.subr.mxu0 0.0
    %800 = vmatpush2.msra.mxu0 0.0
    %801 = vmatprep.subr.mxu0 0.0
    %802 = vmatpush2.msra.mxu0 0.0
    %803 = vmatprep.subr.mxu0 0.0
    %804 = vmatpush2.msra.mxu0 0.0
    %805 = vmatprep.subr.mxu0 0.0
    %806 = vmatpush2.msra.mxu0 0.0
    %807 = vmatprep.subr.mxu0 0.0
    %808 = vmatpush2.msra.mxu0 0.0
    %809 = vmatprep.subr.mxu0 0.0
    %810 = vmatpush2.msra.mxu0 0.0
    %811 = vmatprep.subr.mxu0 0.0
    %812 = vmatpush2.msra.mxu0 0.0
    %813 = vmatprep.subr.mxu0 0.0
    %814 = vmatpush2.msra.mxu0 0.0
    %815 = vmatprep.subr.mxu0 0.0
    %816 = vmatpush2.msra.mxu0 0.0
    %817 = vmatprep.subr.mxu0 0.0
    %818 = vmatpush2.msra.mxu0 0.0
    %819 = vmatprep.subr.mxu0 0.0
    %820 = vmatpush2.msra.mxu0 0.0
    %821 = vmatprep.subr.mxu0 0.0
    %822 = vmatpush2.msra.mxu0 0.0
    %823 = vmatprep.subr.mxu0 0.0
    %824 = vmatpush2.msra.mxu0 0.0
    %825 = vmatprep.subr.mxu0 0.0
    %826 = vmatpush2.msra.mxu0 0.0
    %827 = vmatprep.subr.mxu0 0.0
    %828 = vmatpush2.msra.mxu0 0.0
    %829 = vmatprep.subr.mxu0 0.0
    %830 = vmatpush2.msra.mxu0 0.0
    %831 = vmatprep.mubr.f32.mxu0 0.0
    %832 = vmatmul.mubr.f32.gmra.mxu0 %v312
    %v833 = vpop.f32.mrf.mxu0
    %v834 = vadd.f32 %v308, %v833
    %v835 = vpop.f32.mrf.mxu0
    %836 = vmatprep.mubr.f32.mxu0 0.0
    %837 = vmatmul.mubr.f32.gmra.mxu0 %v315
    %v838 = vpop.f32.mrf.mxu0
    %v839 = vadd.f32 %v309, %v838
    %v840 = vpop.f32.mrf.mxu0
    %841 = vdwg.mxu0
    %842 = vmatprep.subr.mxu0 0.0
    %843 = vmatpush1.msra.mxu0 0.0
    %844 = vmatprep.subr.mxu0 0.0
    %845 = vmatpush1.msra.mxu0 0.0
    %846 = vmatprep.subr.mxu0 0.0
    %847 = vmatpush1.msra.mxu0 0.0
    %848 = vmatprep.subr.mxu0 0.0
    %849 = vmatpush1.msra.mxu0 0.0
    %850 = vmatprep.subr.mxu0 0.0
    %851 = vmatpush1.msra.mxu0 0.0
    %852 = vmatprep.subr.mxu0 0.0
    %853 = vmatpush1.msra.mxu0 0.0
    %854 = vmatprep.subr.mxu0 0.0
    %855 = vmatpush1.msra.mxu0 0.0
    %856 = vmatprep.subr.mxu0 0.0
    %857 = vmatpush1.msra.mxu0 0.0
    %858 = vmatprep.subr.mxu0 0.0
    %859 = vmatpush1.msra.mxu0 0.0
    %860 = vmatprep.subr.mxu0 0.0
    %861 = vmatpush1.msra.mxu0 0.0
    %862 = vmatprep.subr.mxu0 0.0
    %863 = vmatpush1.msra.mxu0 0.0
    %864 = vmatprep.subr.mxu0 0.0
    %865 = vmatpush1.msra.mxu0 0.0
    %866 = vmatprep.subr.mxu0 0.0
    %867 = vmatpush1.msra.mxu0 0.0
    %868 = vmatprep.subr.mxu0 0.0
    %869 = vmatpush1.msra.mxu0 0.0
    %870 = vmatprep.subr.mxu0 0.0
    %871 = vmatpush1.msra.mxu0 %v839
    %872 = vmatprep.subr.mxu0 0.0
    %873 = vmatpush1.msra.mxu0 %v834
    %874 = vmatprep.subr.mxu0 0.0
    %875 = vmatpush2.msra.mxu0 0.0
    %876 = vmatprep.subr.mxu0 0.0
    %877 = vmatpush2.msra.mxu0 0.0
    %878 = vmatprep.subr.mxu0 0.0
    %879 = vmatpush2.msra.mxu0 0.0
    %880 = vmatprep.subr.mxu0 0.0
    %881 = vmatpush2.msra.mxu0 0.0
    %882 = vmatprep.subr.mxu0 0.0
    %883 = vmatpush2.msra.mxu0 0.0
    %884 = vmatprep.subr.mxu0 0.0
    %885 = vmatpush2.msra.mxu0 0.0
    %886 = vmatprep.subr.mxu0 0.0
    %887 = vmatpush2.msra.mxu0 0.0
    %888 = vmatprep.subr.mxu0 0.0
    %889 = vmatpush2.msra.mxu0 0.0
    %890 = vmatprep.subr.mxu0 0.0
    %891 = vmatpush2.msra.mxu0 0.0
    %892 = vmatprep.subr.mxu0 0.0
    %893 = vmatpush2.msra.mxu0 0.0
    %894 = vmatprep.subr.mxu0 0.0
    %895 = vmatpush2.msra.mxu0 0.0
    %896 = vmatprep.subr.mxu0 0.0
    %897 = vmatpush2.msra.mxu0 0.0
    %898 = vmatprep.subr.mxu0 0.0
    %899 = vmatpush2.msra.mxu0 0.0
    %900 = vmatprep.subr.mxu0 0.0
    %901 = vmatpush2.msra.mxu0 0.0
    %902 = vmatprep.subr.mxu0 0.0
    %903 = vmatpush2.msra.mxu0 0.0
    %904 = vmatprep.subr.mxu0 0.0
    %905 = vmatpush2.msra.mxu0 0.0
    %906 = vmatprep.mubr.f32.mxu0 0.0
    %907 = vmatmul.mubr.f32.gmra.mxu0 %v312
    %v908 = vpop.f32.mrf.mxu0
    %v909 = vadd.f32 %v308, %v908
    %v910 = vpop.f32.mrf.mxu0
    %911 = vmatprep.mubr.f32.mxu0 0.0
    %912 = vmatmul.mubr.f32.gmra.mxu0 %v315
    %v913 = vpop.f32.mrf.mxu0
    %v914 = vadd.f32 %v309, %v913
    %v915 = vpop.f32.mrf.mxu0
    %916 = vdwg.mxu0
    %917 = vmatprep.subr.mxu0 0.0
    %918 = vmatpush1.msra.mxu0 0.0
    %919 = vmatprep.subr.mxu0 0.0
    %920 = vmatpush1.msra.mxu0 0.0
    %921 = vmatprep.subr.mxu0 0.0
    %922 = vmatpush1.msra.mxu0 0.0
    %923 = vmatprep.subr.mxu0 0.0
    %924 = vmatpush1.msra.mxu0 0.0
    %925 = vmatprep.subr.mxu0 0.0
    %926 = vmatpush1.msra.mxu0 0.0
    %927 = vmatprep.subr.mxu0 0.0
    %928 = vmatpush1.msra.mxu0 0.0
    %929 = vmatprep.subr.mxu0 0.0
    %930 = vmatpush1.msra.mxu0 0.0
    %931 = vmatprep.subr.mxu0 0.0
    %932 = vmatpush1.msra.mxu0 0.0
    %933 = vmatprep.subr.mxu0 0.0
    %934 = vmatpush1.msra.mxu0 0.0
    %935 = vmatprep.subr.mxu0 0.0
    %936 = vmatpush1.msra.mxu0 0.0
    %937 = vmatprep.subr.mxu0 0.0
    %938 = vmatpush1.msra.mxu0 0.0
    %939 = vmatprep.subr.mxu0 0.0
    %940 = vmatpush1.msra.mxu0 0.0
    %941 = vmatprep.subr.mxu0 0.0
    %942 = vmatpush1.msra.mxu0 0.0
    %943 = vmatprep.subr.mxu0 0.0
    %944 = vmatpush1.msra.mxu0 0.0
    %945 = vmatprep.subr.mxu0 0.0
    %946 = vmatpush1.msra.mxu0 %v914
    %947 = vmatprep.subr.mxu0 0.0
    %948 = vmatpush1.msra.mxu0 %v909
    %949 = vmatprep.subr.mxu0 0.0
    %950 = vmatpush2.msra.mxu0 0.0
    %951 = vmatprep.subr.mxu0 0.0
    %952 = vmatpush2.msra.mxu0 0.0
    %953 = vmatprep.subr.mxu0 0.0
    %954 = vmatpush2.msra.mxu0 0.0
    %955 = vmatprep.subr.mxu0 0.0
    %956 = vmatpush2.msra.mxu0 0.0
    %957 = vmatprep.subr.mxu0 0.0
    %958 = vmatpush2.msra.mxu0 0.0
    %959 = vmatprep.subr.mxu0 0.0
    %960 = vmatpush2.msra.mxu0 0.0
    %961 = vmatprep.subr.mxu0 0.0
    %962 = vmatpush2.msra.mxu0 0.0
    %963 = vmatprep.subr.mxu0 0.0
    %964 = vmatpush2.msra.mxu0 0.0
    %965 = vmatprep.subr.mxu0 0.0
    %966 = vmatpush2.msra.mxu0 0.0
    %967 = vmatprep.subr.mxu0 0.0
    %968 = vmatpush2.msra.mxu0 0.0
    %969 = vmatprep.subr.mxu0 0.0
    %970 = vmatpush2.msra.mxu0 0.0
    %971 = vmatprep.subr.mxu0 0.0
    %972 = vmatpush2.msra.mxu0 0.0
    %973 = vmatprep.subr.mxu0 0.0
    %974 = vmatpush2.msra.mxu0 0.0
    %975 = vmatprep.subr.mxu0 0.0
    %976 = vmatpush2.msra.mxu0 0.0
    %977 = vmatprep.subr.mxu0 0.0
    %978 = vmatpush2.msra.mxu0 0.0
    %979 = vmatprep.subr.mxu0 0.0
    %980 = vmatpush2.msra.mxu0 0.0
    %981 = vmatprep.mubr.f32.mxu0 0.0
    %982 = vmatmul.mubr.f32.gmra.mxu0 %v312
    %v983 = vpop.f32.mrf.mxu0
    %v984 = vadd.f32 %v308, %v983
    %v985 = vpop.f32.mrf.mxu0
    %986 = vmatprep.mubr.f32.mxu0 0.0
    %987 = vmatmul.mubr.f32.gmra.mxu0 %v315
    %v988 = vpop.f32.mrf.mxu0
    %v989 = vadd.f32 %v309, %v988
    %v990 = vpop.f32.mrf.mxu0
    %991 = vdwg.mxu0
    %992 = vmatprep.subr.mxu0 0.0
    %993 = vmatpush1.msra.mxu0 0.0
    %994 = vmatprep.subr.mxu0 0.0
    %995 = vmatpush1.msra.mxu0 0.0
    %996 = vmatprep.subr.mxu0 0.0
    %997 = vmatpush1.msra.mxu0 0.0
    %998 = vmatprep.subr.mxu0 0.0
    %999 = vmatpush1.msra.mxu0 0.0
    %1000 = vmatprep.subr.mxu0 0.0
    %1001 = vmatpush1.msra.mxu0 0.0
    %1002 = vmatprep.subr.mxu0 0.0
    %1003 = vmatpush1.msra.mxu0 0.0
    %1004 = vmatprep.subr.mxu0 0.0
    %1005 = vmatpush1.msra.mxu0 0.0
    %1006 = vmatprep.subr.mxu0 0.0
    %1007 = vmatpush1.msra.mxu0 0.0
    %1008 = vmatprep.subr.mxu0 0.0
    %1009 = vmatpush1.msra.mxu0 0.0
    %1010 = vmatprep.subr.mxu0 0.0
    %1011 = vmatpush1.msra.mxu0 0.0
    %1012 = vmatprep.subr.mxu0 0.0
    %1013 = vmatpush1.msra.mxu0 0.0
    %1014 = vmatprep.subr.mxu0 0.0
    %1015 = vmatpush1.msra.mxu0 0.0
    %1016 = vmatprep.subr.mxu0 0.0
    %1017 = vmatpush1.msra.mxu0 0.0
    %1018 = vmatprep.subr.mxu0 0.0
    %1019 = vmatpush1.msra.mxu0 0.0
    %1020 = vmatprep.subr.mxu0 0.0
    %1021 = vmatpush1.msra.mxu0 %v989
    %1022 = vmatprep.subr.mxu0 0.0
    %1023 = vmatpush1.msra.mxu0 %v984
    %1024 = vmatprep.subr.mxu0 0.0
    %1025 = vmatpush2.msra.mxu0 0.0
    %1026 = vmatprep.subr.mxu0 0.0
    %1027 = vmatpush2.msra.mxu0 0.0
    %1028 = vmatprep.subr.mxu0 0.0
    %1029 = vmatpush2.msra.mxu0 0.0
    %1030 = vmatprep.subr.mxu0 0.0
    %1031 = vmatpush2.msra.mxu0 0.0
    %1032 = vmatprep.subr.mxu0 0.0
    %1033 = vmatpush2.msra.mxu0 0.0
    %1034 = vmatprep.subr.mxu0 0.0
    %1035 = vmatpush2.msra.mxu0 0.0
    %1036 = vmatprep.subr.mxu0 0.0
    %1037 = vmatpush2.msra.mxu0 0.0
    %1038 = vmatprep.subr.mxu0 0.0
    %1039 = vmatpush2.msra.mxu0 0.0
    %1040 = vmatprep.subr.mxu0 0.0
    %1041 = vmatpush2.msra.mxu0 0.0
    %1042 = vmatprep.subr.mxu0 0.0
    %1043 = vmatpush2.msra.mxu0 0.0
    %1044 = vmatprep.subr.mxu0 0.0
    %1045 = vmatpush2.msra.mxu0 0.0
    %1046 = vmatprep.subr.mxu0 0.0
    %1047 = vmatpush2.msra.mxu0 0.0
    %1048 = vmatprep.subr.mxu0 0.0
    %1049 = vmatpush2.msra.mxu0 0.0
    %1050 = vmatprep.subr.mxu0 0.0
    %1051 = vmatpush2.msra.mxu0 0.0
    %1052 = vmatprep.subr.mxu0 0.0
    %1053 = vmatpush2.msra.mxu0 0.0
    %1054 = vmatprep.subr.mxu0 0.0
    %1055 = vmatpush2.msra.mxu0 0.0
    %1056 = vmatprep.mubr.f32.mxu0 0.0
    %1057 = vmatmul.mubr.f32.gmra.mxu0 %v312
    %v1058 = vpop.f32.mrf.mxu0
    %v1059 = vadd.f32 %v308, %v1058
    %v1060 = vpop.f32.mrf.mxu0
    %1061 = vmatprep.mubr.f32.mxu0 0.0
    %1062 = vmatmul.mubr.f32.gmra.mxu0 %v315
    %v1063 = vpop.f32.mrf.mxu0
    %v1064 = vadd.f32 %v309, %v1063
    %v1065 = vpop.f32.mrf.mxu0
    %1066 = vdwg.mxu0
    %v1067 = vld [vmem:[#allocation9] sm:$0xff]
    %v1068 = vld [vmem:[%s7] sm:$0x1]
    %v1070 = vlaneseq
    %v1071 = vshrl.u32 %v1070, 7
    %v1072 = vsub.s32 0, %v1071
    %v1073 = vrot.slane %v1068, %v1072
    %1075 = vmatprep.subr.mxu0 0.0
    %1076 = vmatpush1.msra.mxu0 0.0
    %1077 = vmatprep.subr.mxu0 0.0
    %1078 = vmatpush1.msra.mxu0 0.0
    %1079 = vmatprep.subr.mxu0 0.0
    %1080 = vmatpush1.msra.mxu0 0.0
    %1081 = vmatprep.subr.mxu0 0.0
    %1082 = vmatpush1.msra.mxu0 0.0
    %1083 = vmatprep.subr.mxu0 0.0
    %1084 = vmatpush1.msra.mxu0 0.0
    %1085 = vmatprep.subr.mxu0 0.0
    %1086 = vmatpush1.msra.mxu0 0.0
    %1087 = vmatprep.subr.mxu0 0.0
    %1088 = vmatpush1.msra.mxu0 0.0
    %1089 = vmatprep.subr.mxu0 0.0
    %1090 = vmatpush1.msra.mxu0 0.0
    %1091 = vmatprep.subr.mxu0 0.0
    %1092 = vmatpush1.msra.mxu0 0.0
    %1093 = vmatprep.subr.mxu0 0.0
    %1094 = vmatpush1.msra.mxu0 0.0
    %1095 = vmatprep.subr.mxu0 0.0
    %1096 = vmatpush1.msra.mxu0 0.0
    %1097 = vmatprep.subr.mxu0 0.0
    %1098 = vmatpush1.msra.mxu0 0.0
    %1099 = vmatprep.subr.mxu0 0.0
    %1100 = vmatpush1.msra.mxu0 0.0
    %1101 = vmatprep.subr.mxu0 0.0
    %1102 = vmatpush1.msra.mxu0 0.0
    %1103 = vmatprep.subr.mxu0 0.0
    %1104 = vmatpush1.msra.mxu0 0.0
    %1105 = vmatprep.subr.mxu0 0.0
    %1106 = vmatpush1.msra.mxu0 %v1067
    %1107 = vmatprep.subr.mxu0 0.0
    %1108 = vmatpush2.msra.mxu0 0.0
    %1109 = vmatprep.subr.mxu0 0.0
    %1110 = vmatpush2.msra.mxu0 0.0
    %1111 = vmatprep.subr.mxu0 0.0
    %1112 = vmatpush2.msra.mxu0 0.0
    %1113 = vmatprep.subr.mxu0 0.0
    %1114 = vmatpush2.msra.mxu0 0.0
    %1115 = vmatprep.subr.mxu0 0.0
    %1116 = vmatpush2.msra.mxu0 0.0
    %1117 = vmatprep.subr.mxu0 0.0
    %1118 = vmatpush2.msra.mxu0 0.0
    %1119 = vmatprep.subr.mxu0 0.0
    %1120 = vmatpush2.msra.mxu0 0.0
    %1121 = vmatprep.subr.mxu0 0.0
    %1122 = vmatpush2.msra.mxu0 0.0
    %1123 = vmatprep.subr.mxu0 0.0
    %1124 = vmatpush2.msra.mxu0 0.0
    %1125 = vmatprep.subr.mxu0 0.0
    %1126 = vmatpush2.msra.mxu0 0.0
    %1127 = vmatprep.subr.mxu0 0.0
    %1128 = vmatpush2.msra.mxu0 0.0
    %1129 = vmatprep.subr.mxu0 0.0
    %1130 = vmatpush2.msra.mxu0 0.0
    %1131 = vmatprep.subr.mxu0 0.0
    %1132 = vmatpush2.msra.mxu0 0.0
    %1133 = vmatprep.subr.mxu0 0.0
    %1134 = vmatpush2.msra.mxu0 0.0
    %1135 = vmatprep.subr.mxu0 0.0
    %1136 = vmatpush2.msra.mxu0 0.0
    %1137 = vmatprep.subr.mxu0 0.0
    %1138 = vmatpush2.msra.mxu0 0.0
    %1139 = vmatprep.mubr.f32.mxu0 0.0
    %1140 = vmatmul.mubr.f32.gmra.mxu0 %v133
    %v1141 = vpop.f32.mrf.mxu0
    %v1142 = vadd.f32 %v1073, %v1141
    %v1143 = vpop.f32.mrf.mxu0
    %1144 = vmatprep.mubr.f32.mxu0 0.0
    %1145 = vmatmul.mubr.f32.gmra.mxu0 %v136
    %v1146 = vpop.f32.mrf.mxu0
    %v1147 = vadd.f32 %v1073, %v1146
    %v1148 = vpop.f32.mrf.mxu0
    %1149 = vdwg.mxu0
    %v1150 = vld [vmem:[#allocation10] sm:$0xff]
    %v1151 = vld [vmem:[#allocation10 + $0x8] sm:$0x7]
    %s1152 = sld [smem:[#allocation12]]
    %v1153 = vstv %s1152
    %v1154 = vmul.f32 %v1059, %v1153
    %v1155 = vmul.f32 %v1064, %v1153
    %v1156 = vlaneseq
    %v1157 = vshrl.u32 %v1156, 7
    %v1158 = vsub.s32 0, %v1157
    %v1159 = vrot.slane %v1150, %v1158
    %v1160 = vadd.f32 %v1154, %v1159
    %v1161 = vadd.f32 %v1155, %v1159
    %1163 = vset.pattern.permute.xlu0 0
    %1164 = vperm.xlu0 %1163, %v1142
    %v1165 = vpop.permute.xlu0 %1164
    %1168 = vset.pattern.permute.xlu0 0
    %1169 = vperm.xlu0 %1168, %v1147
    %v1170 = vpop.permute.xlu0 %1169
    %v1172 = vadd.f32 %v1160, %v1165
    %v1173 = vadd.f32 %v1161, %v1170
    %v1174 = vmax.f32 %v1172, 0.0
    %v1175 = vmax.f32 %v1173, 0.0
    %s1176 = sld [smem:[#allocation13]]
    %v1177 = vstv %s1176
    %v1178 = vmul.f32 %v1174, %v1177
    %v1179 = vmul.f32 %v1175, %v1177
    %v1180 = vadd.f32 %v1178, 0.0
    %v1181 = vadd.f32 %v1179, 0.0
    %s1182 = sld [smem:[#allocation12 + $0x1]]
    %v1183 = vstv %s1182
    %v1184 = vmul.f32 %v1059, %v1183
    %v1185 = vmul.f32 %v1064, %v1183
    %v1186 = vlaneseq
    %v1187 = vshrl.u32 %v1186, 7
    %v1188 = vsub.s32 1, %v1187
    %v1189 = vrot.slane %v1150, %v1188
    %v1190 = vadd.f32 %v1184, %v1189
    %v1191 = vadd.f32 %v1185, %v1189
    %1192 = vset.pattern.permute.xlu0 1
    %1193 = vperm.xlu0 %1192, %v1142
    %v1194 = vpop.permute.xlu0 %1193
    %1196 = vset.pattern.permute.xlu0 1
    %1197 = vperm.xlu0 %1196, %v1147
    %v1198 = vpop.permute.xlu0 %1197
    %v1200 = vadd.f32 %v1190, %v1194
    %v1201 = vadd.f32 %v1191, %v1198
    %v1202 = vmax.f32 %v1200, 0.0
    %v1203 = vmax.f32 %v1201, 0.0
    %s1204 = sld [smem:[#allocation13 + $0x1]]
    %v1205 = vstv %s1204
    %v1206 = vmul.f32 %v1202, %v1205
    %v1207 = vmul.f32 %v1203, %v1205
    %v1208 = vadd.f32 %v1180, %v1206
    %v1209 = vadd.f32 %v1181, %v1207
    %s1210 = sld [smem:[#allocation12 + $0x2]]
    %v1211 = vstv %s1210
    %v1212 = vmul.f32 %v1059, %v1211
    %v1213 = vmul.f32 %v1064, %v1211
    %v1214 = vlaneseq
    %v1215 = vshrl.u32 %v1214, 7
    %v1216 = vsub.s32 2, %v1215
    %v1217 = vrot.slane %v1150, %v1216
    %v1218 = vadd.f32 %v1212, %v1217
    %v1219 = vadd.f32 %v1213, %v1217
    %1220 = vset.pattern.permute.xlu0 2
    %1221 = vperm.xlu0 %1220, %v1142
    %v1222 = vpop.permute.xlu0 %1221
    %1224 = vset.pattern.permute.xlu0 2
    %1225 = vperm.xlu0 %1224, %v1147
    %v1226 = vpop.permute.xlu0 %1225
    %v1228 = vadd.f32 %v1218, %v1222
    %v1229 = vadd.f32 %v1219, %v1226
    %v1230 = vmax.f32 %v1228, 0.0
    %v1231 = vmax.f32 %v1229, 0.0
    %s1232 = sld [smem:[#allocation13 + $0x2]]
    %v1233 = vstv %s1232
    %v1234 = vmul.f32 %v1230, %v1233
    %v1235 = vmul.f32 %v1231, %v1233
    %v1236 = vadd.f32 %v1208, %v1234
    %v1237 = vadd.f32 %v1209, %v1235
    %s1238 = sld [smem:[#allocation12 + $0x3]]
    %v1239 = vstv %s1238
    %v1240 = vmul.f32 %v1059, %v1239
    %v1241 = vmul.f32 %v1064, %v1239
    %v1242 = vlaneseq
    %v1243 = vshrl.u32 %v1242, 7
    %v1244 = vsub.s32 3, %v1243
    %v1245 = vrot.slane %v1150, %v1244
    %v1246 = vadd.f32 %v1240, %v1245
    %v1247 = vadd.f32 %v1241, %v1245
    %1248 = vset.pattern.permute.xlu0 3
    %1249 = vperm.xlu0 %1248, %v1142
    %v1250 = vpop.permute.xlu0 %1249
    %1252 = vset.pattern.permute.xlu0 3
    %1253 = vperm.xlu0 %1252, %v1147
    %v1254 = vpop.permute.xlu0 %1253
    %v1256 = vadd.f32 %v1246, %v1250
    %v1257 = vadd.f32 %v1247, %v1254
    %v1258 = vmax.f32 %v1256, 0.0
    %v1259 = vmax.f32 %v1257, 0.0
    %s1260 = sld [smem:[#allocation13 + $0x3]]
    %v1261 = vstv %s1260
    %v1262 = vmul.f32 %v1258, %v1261
    %v1263 = vmul.f32 %v1259, %v1261
    %v1264 = vadd.f32 %v1236, %v1262
    %v1265 = vadd.f32 %v1237, %v1263
    %s1266 = sld [smem:[#allocation12 + $0x4]]
    %v1267 = vstv %s1266
    %v1268 = vmul.f32 %v1059, %v1267
    %v1269 = vmul.f32 %v1064, %v1267
    %v1270 = vlaneseq
    %v1271 = vshrl.u32 %v1270, 7
    %v1272 = vsub.s32 4, %v1271
    %v1273 = vrot.slane %v1150, %v1272
    %v1274 = vadd.f32 %v1268, %v1273
    %v1275 = vadd.f32 %v1269, %v1273
    %1276 = vset.pattern.permute.xlu0 4
    %1277 = vperm.xlu0 %1276, %v1142
    %v1278 = vpop.permute.xlu0 %1277
    %1280 = vset.pattern.permute.xlu0 4
    %1281 = vperm.xlu0 %1280, %v1147
    %v1282 = vpop.permute.xlu0 %1281
    %v1284 = vadd.f32 %v1274, %v1278
    %v1285 = vadd.f32 %v1275, %v1282
    %v1286 = vmax.f32 %v1284, 0.0
    %v1287 = vmax.f32 %v1285, 0.0
    %s1288 = sld [smem:[#allocation13 + $0x4]]
    %v1289 = vstv %s1288
    %v1290 = vmul.f32 %v1286, %v1289
    %v1291 = vmul.f32 %v1287, %v1289
    %v1292 = vadd.f32 %v1264, %v1290
    %v1293 = vadd.f32 %v1265, %v1291
    %s1294 = sld [smem:[#allocation12 + $0x5]]
    %v1295 = vstv %s1294
    %v1296 = vmul.f32 %v1059, %v1295
    %v1297 = vmul.f32 %v1064, %v1295
    %v1298 = vlaneseq
    %v1299 = vshrl.u32 %v1298, 7
    %v1300 = vsub.s32 5, %v1299
    %v1301 = vrot.slane %v1150, %v1300
    %v1302 = vadd.f32 %v1296, %v1301
    %v1303 = vadd.f32 %v1297, %v1301
    %1304 = vset.pattern.permute.xlu0 5
    %1305 = vperm.xlu0 %1304, %v1142
    %v1306 = vpop.permute.xlu0 %1305
    %1308 = vset.pattern.permute.xlu0 5
    %1309 = vperm.xlu0 %1308, %v1147
    %v1310 = vpop.permute.xlu0 %1309
    %v1312 = vadd.f32 %v1302, %v1306
    %v1313 = vadd.f32 %v1303, %v1310
    %v1314 = vmax.f32 %v1312, 0.0
    %v1315 = vmax.f32 %v1313, 0.0
    %s1316 = sld [smem:[#allocation13 + $0x5]]
    %v1317 = vstv %s1316
    %v1318 = vmul.f32 %v1314, %v1317
    %v1319 = vmul.f32 %v1315, %v1317
    %v1320 = vadd.f32 %v1292, %v1318
    %v1321 = vadd.f32 %v1293, %v1319
    %s1322 = sld [smem:[#allocation12 + $0x6]]
    %v1323 = vstv %s1322
    %v1324 = vmul.f32 %v1059, %v1323
    %v1325 = vmul.f32 %v1064, %v1323
    %v1326 = vlaneseq
    %v1327 = vshrl.u32 %v1326, 7
    %v1328 = vsub.s32 6, %v1327
    %v1329 = vrot.slane %v1150, %v1328
    %v1330 = vadd.f32 %v1324, %v1329
    %v1331 = vadd.f32 %v1325, %v1329
    %1332 = vset.pattern.permute.xlu0 6
    %1333 = vperm.xlu0 %1332, %v1142
    %v1334 = vpop.permute.xlu0 %1333
    %1336 = vset.pattern.permute.xlu0 6
    %1337 = vperm.xlu0 %1336, %v1147
    %v1338 = vpop.permute.xlu0 %1337
    %v1340 = vadd.f32 %v1330, %v1334
    %v1341 = vadd.f32 %v1331, %v1338
    %v1342 = vmax.f32 %v1340, 0.0
    %v1343 = vmax.f32 %v1341, 0.0
    %s1344 = sld [smem:[#allocation13 + $0x6]]
    %v1345 = vstv %s1344
    %v1346 = vmul.f32 %v1342, %v1345
    %v1347 = vmul.f32 %v1343, %v1345
    %v1348 = vadd.f32 %v1320, %v1346
    %v1349 = vadd.f32 %v1321, %v1347
    %s1350 = sld [smem:[#allocation12 + $0x7]]
    %v1351 = vstv %s1350
    %v1352 = vmul.f32 %v1059, %v1351
    %v1353 = vmul.f32 %v1064, %v1351
    %v1354 = vlaneseq
    %v1355 = vshrl.u32 %v1354, 7
    %v1356 = vsub.s32 7, %v1355
    %v1357 = vrot.slane %v1150, %v1356
    %v1358 = vadd.f32 %v1352, %v1357
    %v1359 = vadd.f32 %v1353, %v1357
    %1360 = vset.pattern.permute.xlu0 7
    %1361 = vperm.xlu0 %1360, %v1142
    %v1362 = vpop.permute.xlu0 %1361
    %1364 = vset.pattern.permute.xlu0 7
    %1365 = vperm.xlu0 %1364, %v1147
    %v1366 = vpop.permute.xlu0 %1365
    %v1368 = vadd.f32 %v1358, %v1362
    %v1369 = vadd.f32 %v1359, %v1366
    %v1370 = vmax.f32 %v1368, 0.0
    %v1371 = vmax.f32 %v1369, 0.0
    %s1372 = sld [smem:[#allocation13 + $0x7]]
    %v1373 = vstv %s1372
    %v1374 = vmul.f32 %v1370, %v1373
    %v1375 = vmul.f32 %v1371, %v1373
    %v1376 = vadd.f32 %v1348, %v1374
    %v1377 = vadd.f32 %v1349, %v1375
    %s1378 = sld [smem:[#allocation12 + $0x8]]
    %v1379 = vstv %s1378
    %v1380 = vmul.f32 %v1059, %v1379
    %v1381 = vmul.f32 %v1064, %v1379
    %v1382 = vlaneseq
    %v1383 = vshrl.u32 %v1382, 7
    %v1384 = vsub.s32 0, %v1383
    %v1385 = vrot.slane %v1151, %v1384
    %v1386 = vadd.f32 %v1380, %v1385
    %v1387 = vadd.f32 %v1381, %v1385
    %1388 = vset.pattern.permute.xlu0 8
    %1389 = vperm.xlu0 %1388, %v1142
    %v1390 = vpop.permute.xlu0 %1389
    %1392 = vset.pattern.permute.xlu0 8
    %1393 = vperm.xlu0 %1392, %v1147
    %v1394 = vpop.permute.xlu0 %1393
    %v1396 = vadd.f32 %v1386, %v1390
    %v1397 = vadd.f32 %v1387, %v1394
    %v1398 = vmax.f32 %v1396, 0.0
    %v1399 = vmax.f32 %v1397, 0.0
    %s1400 = sld [smem:[#allocation13 + $0x8]]
    %v1401 = vstv %s1400
    %v1402 = vmul.f32 %v1398, %v1401
    %v1403 = vmul.f32 %v1399, %v1401
    %v1404 = vadd.f32 %v1376, %v1402
    %v1405 = vadd.f32 %v1377, %v1403
    %s1406 = sld [smem:[#allocation12 + $0x9]]
    %v1407 = vstv %s1406
    %v1408 = vmul.f32 %v1059, %v1407
    %v1409 = vmul.f32 %v1064, %v1407
    %v1410 = vlaneseq
    %v1411 = vshrl.u32 %v1410, 7
    %v1412 = vsub.s32 1, %v1411
    %v1413 = vrot.slane %v1151, %v1412
    %v1414 = vadd.f32 %v1408, %v1413
    %v1415 = vadd.f32 %v1409, %v1413
    %1416 = vset.pattern.permute.xlu0 9
    %1417 = vperm.xlu0 %1416, %v1142
    %v1418 = vpop.permute.xlu0 %1417
    %1420 = vset.pattern.permute.xlu0 9
    %1421 = vperm.xlu0 %1420, %v1147
    %v1422 = vpop.permute.xlu0 %1421
    %v1424 = vadd.f32 %v1414, %v1418
    %v1425 = vadd.f32 %v1415, %v1422
    %v1426 = vmax.f32 %v1424, 0.0
    %v1427 = vmax.f32 %v1425, 0.0
    %s1428 = sld [smem:[#allocation13 + $0x9]]
    %v1429 = vstv %s1428
    %v1430 = vmul.f32 %v1426, %v1429
    %v1431 = vmul.f32 %v1427, %v1429
    %v1432 = vadd.f32 %v1404, %v1430
    %v1433 = vadd.f32 %v1405, %v1431
    %s1434 = sld [smem:[#allocation12 + $0xa]]
    %v1435 = vstv %s1434
    %v1436 = vmul.f32 %v1059, %v1435
    %v1437 = vmul.f32 %v1064, %v1435
    %v1438 = vlaneseq
    %v1439 = vshrl.u32 %v1438, 7
    %v1440 = vsub.s32 2, %v1439
    %v1441 = vrot.slane %v1151, %v1440
    %v1442 = vadd.f32 %v1436, %v1441
    %v1443 = vadd.f32 %v1437, %v1441
    %1444 = vset.pattern.permute.xlu0 10
    %1445 = vperm.xlu0 %1444, %v1142
    %v1446 = vpop.permute.xlu0 %1445
    %1448 = vset.pattern.permute.xlu0 10
    %1449 = vperm.xlu0 %1448, %v1147
    %v1450 = vpop.permute.xlu0 %1449
    %v1452 = vadd.f32 %v1442, %v1446
    %v1453 = vadd.f32 %v1443, %v1450
    %v1454 = vmax.f32 %v1452, 0.0
    %v1455 = vmax.f32 %v1453, 0.0
    %s1456 = sld [smem:[#allocation13 + $0xa]]
    %v1457 = vstv %s1456
    %v1458 = vmul.f32 %v1454, %v1457
    %v1459 = vmul.f32 %v1455, %v1457
    %v1460 = vadd.f32 %v1432, %v1458
    %v1461 = vadd.f32 %v1433, %v1459
    %s1462 = sld [smem:[#allocation2]]
    %v1463 = vstv %s1462
    %v1464 = vadd.f32 %v1460, %v1463
    %v1465 = vadd.f32 %v1461, %v1463
    %v1466 = vmul.f32 %v1464, 0.1
    %v1467 = vmul.f32 %v1465, 0.1
    %1468 = vmatprep.subr.mxu0 0.0
    %1469 = vmatpush1.msra.mxu0 0.0
    %1470 = vmatprep.subr.mxu0 0.0
    %1471 = vmatpush1.msra.mxu0 0.0
    %1472 = vmatprep.subr.mxu0 0.0
    %1473 = vmatpush1.msra.mxu0 0.0
    %1474 = vmatprep.subr.mxu0 0.0
    %1475 = vmatpush1.msra.mxu0 0.0
    %1476 = vmatprep.subr.mxu0 0.0
    %1477 = vmatpush1.msra.mxu0 0.0
    %1478 = vmatprep.subr.mxu0 0.0
    %1479 = vmatpush1.msra.mxu0 0.0
    %1480 = vmatprep.subr.mxu0 0.0
    %1481 = vmatpush1.msra.mxu0 0.0
    %1482 = vmatprep.subr.mxu0 0.0
    %1483 = vmatpush1.msra.mxu0 0.0
    %1484 = vmatprep.subr.mxu0 0.0
    %1485 = vmatpush1.msra.mxu0 0.0
    %1486 = vmatprep.subr.mxu0 0.0
    %1487 = vmatpush1.msra.mxu0 0.0
    %1488 = vmatprep.subr.mxu0 0.0
    %1489 = vmatpush1.msra.mxu0 0.0
    %1490 = vmatprep.subr.mxu0 0.0
    %1491 = vmatpush1.msra.mxu0 0.0
    %1492 = vmatprep.subr.mxu0 0.0
    %1493 = vmatpush1.msra.mxu0 0.0
    %1494 = vmatprep.subr.mxu0 0.0
    %1495 = vmatpush1.msra.mxu0 0.0
    %1496 = vmatprep.subr.mxu0 0.0
    %1497 = vmatpush1.msra.mxu0 %v1465
    %1498 = vmatprep.subr.mxu0 0.0
    %1499 = vmatpush1.msra.mxu0 %v1464
    %1500 = vmatprep.subr.mxu0 0.0
    %1501 = vmatpush2.msra.mxu0 0.0
    %1502 = vmatprep.subr.mxu0 0.0
    %1503 = vmatpush2.msra.mxu0 0.0
    %1504 = vmatprep.subr.mxu0 0.0
    %1505 = vmatpush2.msra.mxu0 0.0
    %1506 = vmatprep.subr.mxu0 0.0
    %1507 = vmatpush2.msra.mxu0 0.0
    %1508 = vmatprep.subr.mxu0 0.0
    %1509 = vmatpush2.msra.mxu0 0.0
    %1510 = vmatprep.subr.mxu0 0.0
    %1511 = vmatpush2.msra.mxu0 0.0
    %1512 = vmatprep.subr.mxu0 0.0
    %1513 = vmatpush2.msra.mxu0 0.0
    %1514 = vmatprep.subr.mxu0 0.0
    %1515 = vmatpush2.msra.mxu0 0.0
    %1516 = vmatprep.subr.mxu0 0.0
    %1517 = vmatpush2.msra.mxu0 0.0
    %1518 = vmatprep.subr.mxu0 0.0
    %1519 = vmatpush2.msra.mxu0 0.0
    %1520 = vmatprep.subr.mxu0 0.0
    %1521 = vmatpush2.msra.mxu0 0.0
    %1522 = vmatprep.subr.mxu0 0.0
    %1523 = vmatpush2.msra.mxu0 0.0
    %1524 = vmatprep.subr.mxu0 0.0
    %1525 = vmatpush2.msra.mxu0 0.0
    %1526 = vmatprep.subr.mxu0 0.0
    %1527 = vmatpush2.msra.mxu0 0.0
    %1528 = vmatprep.subr.mxu0 0.0
    %1529 = vmatpush2.msra.mxu0 0.0
    %1530 = vmatprep.subr.mxu0 0.0
    %1531 = vmatpush2.msra.mxu0 0.0
    %1532 = vmatprep.mubr.f32.mxu0 0.0
    %1533 = vmatmul.mubr.f32.gmra.mxu0 %v312
    %v1534 = vpop.f32.mrf.mxu0
    %v1535 = vadd.f32 %v1466, %v1534
    %v1536 = vpop.f32.mrf.mxu0
    %1537 = vmatprep.mubr.f32.mxu0 0.0
    %1538 = vmatmul.mubr.f32.gmra.mxu0 %v315
    %v1539 = vpop.f32.mrf.mxu0
    %v1540 = vadd.f32 %v1467, %v1539
    %v1541 = vpop.f32.mrf.mxu0
    %1542 = vdwg.mxu0
    %1543 = vmatprep.subr.mxu0 0.0
    %1544 = vmatpush1.msra.mxu0 0.0
    %1545 = vmatprep.subr.mxu0 0.0
    %1546 = vmatpush1.msra.mxu0 0.0
    %1547 = vmatprep.subr.mxu0 0.0
    %1548 = vmatpush1.msra.mxu0 0.0
    %1549 = vmatprep.subr.mxu0 0.0
    %1550 = vmatpush1.msra.mxu0 0.0
    %1551 = vmatprep.subr.mxu0 0.0
    %1552 = vmatpush1.msra.mxu0 0.0
    %1553 = vmatprep.subr.mxu0 0.0
    %1554 = vmatpush1.msra.mxu0 0.0
    %1555 = vmatprep.subr.mxu0 0.0
    %1556 = vmatpush1.msra.mxu0 0.0
    %1557 = vmatprep.subr.mxu0 0.0
    %1558 = vmatpush1.msra.mxu0 0.0
    %1559 = vmatprep.subr.mxu0 0.0
    %1560 = vmatpush1.msra.mxu0 0.0
    %1561 = vmatprep.subr.mxu0 0.0
    %1562 = vmatpush1.msra.mxu0 0.0
    %1563 = vmatprep.subr.mxu0 0.0
    %1564 = vmatpush1.msra.mxu0 0.0
    %1565 = vmatprep.subr.mxu0 0.0
    %1566 = vmatpush1.msra.mxu0 0.0
    %1567 = vmatprep.subr.mxu0 0.0
    %1568 = vmatpush1.msra.mxu0 0.0
    %1569 = vmatprep.subr.mxu0 0.0
    %1570 = vmatpush1.msra.mxu0 0.0
    %1571 = vmatprep.subr.mxu0 0.0
    %1572 = vmatpush1.msra.mxu0 %v1540
    %1573 = vmatprep.subr.mxu0 0.0
    %1574 = vmatpush1.msra.mxu0 %v1535
    %1575 = vmatprep.subr.mxu0 0.0
    %1576 = vmatpush2.msra.mxu0 0.0
    %1577 = vmatprep.subr.mxu0 0.0
    %1578 = vmatpush2.msra.mxu0 0.0
    %1579 = vmatprep.subr.mxu0 0.0
    %1580 = vmatpush2.msra.mxu0 0.0
    %1581 = vmatprep.subr.mxu0 0.0
    %1582 = vmatpush2.msra.mxu0 0.0
    %1583 = vmatprep.subr.mxu0 0.0
    %1584 = vmatpush2.msra.mxu0 0.0
    %1585 = vmatprep.subr.mxu0 0.0
    %1586 = vmatpush2.msra.mxu0 0.0
    %1587 = vmatprep.subr.mxu0 0.0
    %1588 = vmatpush2.msra.mxu0 0.0
    %1589 = vmatprep.subr.mxu0 0.0
    %1590 = vmatpush2.msra.mxu0 0.0
    %1591 = vmatprep.subr.mxu0 0.0
    %1592 = vmatpush2.msra.mxu0 0.0
    %1593 = vmatprep.subr.mxu0 0.0
    %1594 = vmatpush2.msra.mxu0 0.0
    %1595 = vmatprep.subr.mxu0 0.0
    %1596 = vmatpush2.msra.mxu0 0.0
    %1597 = vmatprep.subr.mxu0 0.0
    %1598 = vmatpush2.msra.mxu0 0.0
    %1599 = vmatprep.subr.mxu0 0.0
    %1600 = vmatpush2.msra.mxu0 0.0
    %1601 = vmatprep.subr.mxu0 0.0
    %1602 = vmatpush2.msra.mxu0 0.0
    %1603 = vmatprep.subr.mxu0 0.0
    %1604 = vmatpush2.msra.mxu0 0.0
    %1605 = vmatprep.subr.mxu0 0.0
    %1606 = vmatpush2.msra.mxu0 0.0
    %1607 = vmatprep.mubr.f32.mxu0 0.0
    %1608 = vmatmul.mubr.f32.gmra.mxu0 %v312
    %v1609 = vpop.f32.mrf.mxu0
    %v1610 = vadd.f32 %v1466, %v1609
    %v1611 = vpop.f32.mrf.mxu0
    %1612 = vmatprep.mubr.f32.mxu0 0.0
    %1613 = vmatmul.mubr.f32.gmra.mxu0 %v315
    %v1614 = vpop.f32.mrf.mxu0
    %v1615 = vadd.f32 %v1467, %v1614
    %v1616 = vpop.f32.mrf.mxu0
    %1617 = vdwg.mxu0
    %1618 = vmatprep.subr.mxu0 0.0
    %1619 = vmatpush1.msra.mxu0 0.0
    %1620 = vmatprep.subr.mxu0 0.0
    %1621 = vmatpush1.msra.mxu0 0.0
    %1622 = vmatprep.subr.mxu0 0.0
    %1623 = vmatpush1.msra.mxu0 0.0
    %1624 = vmatprep.subr.mxu0 0.0
    %1625 = vmatpush1.msra.mxu0 0.0
    %1626 = vmatprep.subr.mxu0 0.0
    %1627 = vmatpush1.msra.mxu0 0.0
    %1628 = vmatprep.subr.mxu0 0.0
    %1629 = vmatpush1.msra.mxu0 0.0
    %1630 = vmatprep.subr.mxu0 0.0
    %1631 = vmatpush1.msra.mxu0 0.0
    %1632 = vmatprep.subr.mxu0 0.0
    %1633 = vmatpush1.msra.mxu0 0.0
    %1634 = vmatprep.subr.mxu0 0.0
    %1635 = vmatpush1.msra.mxu0 0.0
    %1636 = vmatprep.subr.mxu0 0.0
    %1637 = vmatpush1.msra.mxu0 0.0
    %1638 = vmatprep.subr.mxu0 0.0
    %1639 = vmatpush1.msra.mxu0 0.0
    %1640 = vmatprep.subr.mxu0 0.0
    %1641 = vmatpush1.msra.mxu0 0.0
    %1642 = vmatprep.subr.mxu0 0.0
    %1643 = vmatpush1.msra.mxu0 0.0
    %1644 = vmatprep.subr.mxu0 0.0
    %1645 = vmatpush1.msra.mxu0 0.0
    %1646 = vmatprep.subr.mxu0 0.0
    %1647 = vmatpush1.msra.mxu0 %v1615
    %1648 = vmatprep.subr.mxu0 0.0
    %1649 = vmatpush1.msra.mxu0 %v1610
    %1650 = vmatprep.subr.mxu0 0.0
    %1651 = vmatpush2.msra.mxu0 0.0
    %1652 = vmatprep.subr.mxu0 0.0
    %1653 = vmatpush2.msra.mxu0 0.0
    %1654 = vmatprep.subr.mxu0 0.0
    %1655 = vmatpush2.msra.mxu0 0.0
    %1656 = vmatprep.subr.mxu0 0.0
    %1657 = vmatpush2.msra.mxu0 0.0
    %1658 = vmatprep.subr.mxu0 0.0
    %1659 = vmatpush2.msra.mxu0 0.0
    %1660 = vmatprep.subr.mxu0 0.0
    %1661 = vmatpush2.msra.mxu0 0.0
    %1662 = vmatprep.subr.mxu0 0.0
    %1663 = vmatpush2.msra.mxu0 0.0
    %1664 = vmatprep.subr.mxu0 0.0
    %1665 = vmatpush2.msra.mxu0 0.0
    %1666 = vmatprep.subr.mxu0 0.0
    %1667 = vmatpush2.msra.mxu0 0.0
    %1668 = vmatprep.subr.mxu0 0.0
    %1669 = vmatpush2.msra.mxu0 0.0
    %1670 = vmatprep.subr.mxu0 0.0
    %1671 = vmatpush2.msra.mxu0 0.0
    %1672 = vmatprep.subr.mxu0 0.0
    %1673 = vmatpush2.msra.mxu0 0.0
    %1674 = vmatprep.subr.mxu0 0.0
    %1675 = vmatpush2.msra.mxu0 0.0
    %1676 = vmatprep.subr.mxu0 0.0
    %1677 = vmatpush2.msra.mxu0 0.0
    %1678 = vmatprep.subr.mxu0 0.0
    %1679 = vmatpush2.msra.mxu0 0.0
    %1680 = vmatprep.subr.mxu0 0.0
    %1681 = vmatpush2.msra.mxu0 0.0
    %1682 = vmatprep.mubr.f32.mxu0 0.0
    %1683 = vmatmul.mubr.f32.gmra.mxu0 %v312
    %v1684 = vpop.f32.mrf.mxu0
    %v1685 = vadd.f32 %v1466, %v1684
    %v1686 = vpop.f32.mrf.mxu0
    %1687 = vmatprep.mubr.f32.mxu0 0.0
    %1688 = vmatmul.mubr.f32.gmra.mxu0 %v315
    %v1689 = vpop.f32.mrf.mxu0
    %v1690 = vadd.f32 %v1467, %v1689
    %v1691 = vpop.f32.mrf.mxu0
    %1692 = vdwg.mxu0
    %1693 = vmatprep.subr.mxu0 0.0
    %1694 = vmatpush1.msra.mxu0 0.0
    %1695 = vmatprep.subr.mxu0 0.0
    %1696 = vmatpush1.msra.mxu0 0.0
    %1697 = vmatprep.subr.mxu0 0.0
    %1698 = vmatpush1.msra.mxu0 0.0
    %1699 = vmatprep.subr.mxu0 0.0
    %1700 = vmatpush1.msra.mxu0 0.0
    %1701 = vmatprep.subr.mxu0 0.0
    %1702 = vmatpush1.msra.mxu0 0.0
    %1703 = vmatprep.subr.mxu0 0.0
    %1704 = vmatpush1.msra.mxu0 0.0
    %1705 = vmatprep.subr.mxu0 0.0
    %1706 = vmatpush1.msra.mxu0 0.0
    %1707 = vmatprep.subr.mxu0 0.0
    %1708 = vmatpush1.msra.mxu0 0.0
    %1709 = vmatprep.subr.mxu0 0.0
    %1710 = vmatpush1.msra.mxu0 0.0
    %1711 = vmatprep.subr.mxu0 0.0
    %1712 = vmatpush1.msra.mxu0 0.0
    %1713 = vmatprep.subr.mxu0 0.0
    %1714 = vmatpush1.msra.mxu0 0.0
    %1715 = vmatprep.subr.mxu0 0.0
    %1716 = vmatpush1.msra.mxu0 0.0
    %1717 = vmatprep.subr.mxu0 0.0
    %1718 = vmatpush1.msra.mxu0 0.0
    %1719 = vmatprep.subr.mxu0 0.0
    %1720 = vmatpush1.msra.mxu0 0.0
    %1721 = vmatprep.subr.mxu0 0.0
    %1722 = vmatpush1.msra.mxu0 %v1690
    %1723 = vmatprep.subr.mxu0 0.0
    %1724 = vmatpush1.msra.mxu0 %v1685
    %1725 = vmatprep.subr.mxu0 0.0
    %1726 = vmatpush2.msra.mxu0 0.0
    %1727 = vmatprep.subr.mxu0 0.0
    %1728 = vmatpush2.msra.mxu0 0.0
    %1729 = vmatprep.subr.mxu0 0.0
    %1730 = vmatpush2.msra.mxu0 0.0
    %1731 = vmatprep.subr.mxu0 0.0
    %1732 = vmatpush2.msra.mxu0 0.0
    %1733 = vmatprep.subr.mxu0 0.0
    %1734 = vmatpush2.msra.mxu0 0.0
    %1735 = vmatprep.subr.mxu0 0.0
    %1736 = vmatpush2.msra.mxu0 0.0
    %1737 = vmatprep.subr.mxu0 0.0
    %1738 = vmatpush2.msra.mxu0 0.0
    %1739 = vmatprep.subr.mxu0 0.0
    %1740 = vmatpush2.msra.mxu0 0.0
    %1741 = vmatprep.subr.mxu0 0.0
    %1742 = vmatpush2.msra.mxu0 0.0
    %1743 = vmatprep.subr.mxu0 0.0
    %1744 = vmatpush2.msra.mxu0 0.0
    %1745 = vmatprep.subr.mxu0 0.0
    %1746 = vmatpush2.msra.mxu0 0.0
    %1747 = vmatprep.subr.mxu0 0.0
    %1748 = vmatpush2.msra.mxu0 0.0
    %1749 = vmatprep.subr.mxu0 0.0
    %1750 = vmatpush2.msra.mxu0 0.0
    %1751 = vmatprep.subr.mxu0 0.0
    %1752 = vmatpush2.msra.mxu0 0.0
    %1753 = vmatprep.subr.mxu0 0.0
    %1754 = vmatpush2.msra.mxu0 0.0
    %1755 = vmatprep.subr.mxu0 0.0
    %1756 = vmatpush2.msra.mxu0 0.0
    %1757 = vmatprep.mubr.f32.mxu0 0.0
    %1758 = vmatmul.mubr.f32.gmra.mxu0 %v312
    %v1759 = vpop.f32.mrf.mxu0
    %v1760 = vadd.f32 %v1466, %v1759
    %v1761 = vpop.f32.mrf.mxu0
    %1762 = vmatprep.mubr.f32.mxu0 0.0
    %1763 = vmatmul.mubr.f32.gmra.mxu0 %v315
    %v1764 = vpop.f32.mrf.mxu0
    %v1765 = vadd.f32 %v1467, %v1764
    %v1766 = vpop.f32.mrf.mxu0
    %1767 = vdwg.mxu0
    %1768 = vmatprep.subr.mxu0 0.0
    %1769 = vmatpush1.msra.mxu0 0.0
    %1770 = vmatprep.subr.mxu0 0.0
    %1771 = vmatpush1.msra.mxu0 0.0
    %1772 = vmatprep.subr.mxu0 0.0
    %1773 = vmatpush1.msra.mxu0 0.0
    %1774 = vmatprep.subr.mxu0 0.0
    %1775 = vmatpush1.msra.mxu0 0.0
    %1776 = vmatprep.subr.mxu0 0.0
    %1777 = vmatpush1.msra.mxu0 0.0
    %1778 = vmatprep.subr.mxu0 0.0
    %1779 = vmatpush1.msra.mxu0 0.0
    %1780 = vmatprep.subr.mxu0 0.0
    %1781 = vmatpush1.msra.mxu0 0.0
    %1782 = vmatprep.subr.mxu0 0.0
    %1783 = vmatpush1.msra.mxu0 0.0
    %1784 = vmatprep.subr.mxu0 0.0
    %1785 = vmatpush1.msra.mxu0 0.0
    %1786 = vmatprep.subr.mxu0 0.0
    %1787 = vmatpush1.msra.mxu0 0.0
    %1788 = vmatprep.subr.mxu0 0.0
    %1789 = vmatpush1.msra.mxu0 0.0
    %1790 = vmatprep.subr.mxu0 0.0
    %1791 = vmatpush1.msra.mxu0 0.0
    %1792 = vmatprep.subr.mxu0 0.0
    %1793 = vmatpush1.msra.mxu0 0.0
    %1794 = vmatprep.subr.mxu0 0.0
    %1795 = vmatpush1.msra.mxu0 0.0
    %1796 = vmatprep.subr.mxu0 0.0
    %1797 = vmatpush1.msra.mxu0 %v1765
    %1798 = vmatprep.subr.mxu0 0.0
    %1799 = vmatpush1.msra.mxu0 %v1760
    %1800 = vmatprep.subr.mxu0 0.0
    %1801 = vmatpush2.msra.mxu0 0.0
    %1802 = vmatprep.subr.mxu0 0.0
    %1803 = vmatpush2.msra.mxu0 0.0
    %1804 = vmatprep.subr.mxu0 0.0
    %1805 = vmatpush2.msra.mxu0 0.0
    %1806 = vmatprep.subr.mxu0 0.0
    %1807 = vmatpush2.msra.mxu0 0.0
    %1808 = vmatprep.subr.mxu0 0.0
    %1809 = vmatpush2.msra.mxu0 0.0
    %1810 = vmatprep.subr.mxu0 0.0
    %1811 = vmatpush2.msra.mxu0 0.0
    %1812 = vmatprep.subr.mxu0 0.0
    %1813 = vmatpush2.msra.mxu0 0.0
    %1814 = vmatprep.subr.mxu0 0.0
    %1815 = vmatpush2.msra.mxu0 0.0
    %1816 = vmatprep.subr.mxu0 0.0
    %1817 = vmatpush2.msra.mxu0 0.0
    %1818 = vmatprep.subr.mxu0 0.0
    %1819 = vmatpush2.msra.mxu0 0.0
    %1820 = vmatprep.subr.mxu0 0.0
    %1821 = vmatpush2.msra.mxu0 0.0
    %1822 = vmatprep.subr.mxu0 0.0
    %1823 = vmatpush2.msra.mxu0 0.0
    %1824 = vmatprep.subr.mxu0 0.0
    %1825 = vmatpush2.msra.mxu0 0.0
    %1826 = vmatprep.subr.mxu0 0.0
    %1827 = vmatpush2.msra.mxu0 0.0
    %1828 = vmatprep.subr.mxu0 0.0
    %1829 = vmatpush2.msra.mxu0 0.0
    %1830 = vmatprep.subr.mxu0 0.0
    %1831 = vmatpush2.msra.mxu0 0.0
    %1832 = vmatprep.mubr.f32.mxu0 0.0
    %1833 = vmatmul.mubr.f32.gmra.mxu0 %v312
    %v1834 = vpop.f32.mrf.mxu0
    %v1835 = vadd.f32 %v1466, %v1834
    %v1836 = vpop.f32.mrf.mxu0
    %1837 = vmatprep.mubr.f32.mxu0 0.0
    %1838 = vmatmul.mubr.f32.gmra.mxu0 %v315
    %v1839 = vpop.f32.mrf.mxu0
    %v1840 = vadd.f32 %v1467, %v1839
    %v1841 = vpop.f32.mrf.mxu0
    %1842 = vdwg.mxu0
    %1843 = vmatprep.subr.mxu0 0.0
    %1844 = vmatpush1.msra.mxu0 0.0
    %1845 = vmatprep.subr.mxu0 0.0
    %1846 = vmatpush1.msra.mxu0 0.0
    %1847 = vmatprep.subr.mxu0 0.0
    %1848 = vmatpush1.msra.mxu0 0.0
    %1849 = vmatprep.subr.mxu0 0.0
    %1850 = vmatpush1.msra.mxu0 0.0
    %1851 = vmatprep.subr.mxu0 0.0
    %1852 = vmatpush1.msra.mxu0 0.0
    %1853 = vmatprep.subr.mxu0 0.0
    %1854 = vmatpush1.msra.mxu0 0.0
    %1855 = vmatprep.subr.mxu0 0.0
    %1856 = vmatpush1.msra.mxu0 0.0
    %1857 = vmatprep.subr.mxu0 0.0
    %1858 = vmatpush1.msra.mxu0 0.0
    %1859 = vmatprep.subr.mxu0 0.0
    %1860 = vmatpush1.msra.mxu0 0.0
    %1861 = vmatprep.subr.mxu0 0.0
    %1862 = vmatpush1.msra.mxu0 0.0
    %1863 = vmatprep.subr.mxu0 0.0
    %1864 = vmatpush1.msra.mxu0 0.0
    %1865 = vmatprep.subr.mxu0 0.0
    %1866 = vmatpush1.msra.mxu0 0.0
    %1867 = vmatprep.subr.mxu0 0.0
    %1868 = vmatpush1.msra.mxu0 0.0
    %1869 = vmatprep.subr.mxu0 0.0
    %1870 = vmatpush1.msra.mxu0 0.0
    %1871 = vmatprep.subr.mxu0 0.0
    %1872 = vmatpush1.msra.mxu0 %v1840
    %1873 = vmatprep.subr.mxu0 0.0
    %1874 = vmatpush1.msra.mxu0 %v1835
    %1875 = vmatprep.subr.mxu0 0.0
    %1876 = vmatpush2.msra.mxu0 0.0
    %1877 = vmatprep.subr.mxu0 0.0
    %1878 = vmatpush2.msra.mxu0 0.0
    %1879 = vmatprep.subr.mxu0 0.0
    %1880 = vmatpush2.msra.mxu0 0.0
    %1881 = vmatprep.subr.mxu0 0.0
    %1882 = vmatpush2.msra.mxu0 0.0
    %1883 = vmatprep.subr.mxu0 0.0
    %1884 = vmatpush2.msra.mxu0 0.0
    %1885 = vmatprep.subr.mxu0 0.0
    %1886 = vmatpush2.msra.mxu0 0.0
    %1887 = vmatprep.subr.mxu0 0.0
    %1888 = vmatpush2.msra.mxu0 0.0
    %1889 = vmatprep.subr.mxu0 0.0
    %1890 = vmatpush2.msra.mxu0 0.0
    %1891 = vmatprep.subr.mxu0 0.0
    %1892 = vmatpush2.msra.mxu0 0.0
    %1893 = vmatprep.subr.mxu0 0.0
    %1894 = vmatpush2.msra.mxu0 0.0
    %1895 = vmatprep.subr.mxu0 0.0
    %1896 = vmatpush2.msra.mxu0 0.0
    %1897 = vmatprep.subr.mxu0 0.0
    %1898 = vmatpush2.msra.mxu0 0.0
    %1899 = vmatprep.subr.mxu0 0.0
    %1900 = vmatpush2.msra.mxu0 0.0
    %1901 = vmatprep.subr.mxu0 0.0
    %1902 = vmatpush2.msra.mxu0 0.0
    %1903 = vmatprep.subr.mxu0 0.0
    %1904 = vmatpush2.msra.mxu0 0.0
    %1905 = vmatprep.subr.mxu0 0.0
    %1906 = vmatpush2.msra.mxu0 0.0
    %1907 = vmatprep.mubr.f32.mxu0 0.0
    %1908 = vmatmul.mubr.f32.gmra.mxu0 %v312
    %v1909 = vpop.f32.mrf.mxu0
    %v1910 = vadd.f32 %v1466, %v1909
    %v1911 = vpop.f32.mrf.mxu0
    %1912 = vmatprep.mubr.f32.mxu0 0.0
    %1913 = vmatmul.mubr.f32.gmra.mxu0 %v315
    %v1914 = vpop.f32.mrf.mxu0
    %v1915 = vadd.f32 %v1467, %v1914
    %v1916 = vpop.f32.mrf.mxu0
    %1917 = vdwg.mxu0
    %1918 = vmatprep.subr.mxu0 0.0
    %1919 = vmatpush1.msra.mxu0 0.0
    %1920 = vmatprep.subr.mxu0 0.0
    %1921 = vmatpush1.msra.mxu0 0.0
    %1922 = vmatprep.subr.mxu0 0.0
    %1923 = vmatpush1.msra.mxu0 0.0
    %1924 = vmatprep.subr.mxu0 0.0
    %1925 = vmatpush1.msra.mxu0 0.0
    %1926 = vmatprep.subr.mxu0 0.0
    %1927 = vmatpush1.msra.mxu0 0.0
    %1928 = vmatprep.subr.mxu0 0.0
    %1929 = vmatpush1.msra.mxu0 0.0
    %1930 = vmatprep.subr.mxu0 0.0
    %1931 = vmatpush1.msra.mxu0 0.0
    %1932 = vmatprep.subr.mxu0 0.0
    %1933 = vmatpush1.msra.mxu0 0.0
    %1934 = vmatprep.subr.mxu0 0.0
    %1935 = vmatpush1.msra.mxu0 0.0
    %1936 = vmatprep.subr.mxu0 0.0
    %1937 = vmatpush1.msra.mxu0 0.0
    %1938 = vmatprep.subr.mxu0 0.0
    %1939 = vmatpush1.msra.mxu0 0.0
    %1940 = vmatprep.subr.mxu0 0.0
    %1941 = vmatpush1.msra.mxu0 0.0
    %1942 = vmatprep.subr.mxu0 0.0
    %1943 = vmatpush1.msra.mxu0 0.0
    %1944 = vmatprep.subr.mxu0 0.0
    %1945 = vmatpush1.msra.mxu0 0.0
    %1946 = vmatprep.subr.mxu0 0.0
    %1947 = vmatpush1.msra.mxu0 %v1915
    %1948 = vmatprep.subr.mxu0 0.0
    %1949 = vmatpush1.msra.mxu0 %v1910
    %1950 = vmatprep.subr.mxu0 0.0
    %1951 = vmatpush2.msra.mxu0 0.0
    %1952 = vmatprep.subr.mxu0 0.0
    %1953 = vmatpush2.msra.mxu0 0.0
    %1954 = vmatprep.subr.mxu0 0.0
    %1955 = vmatpush2.msra.mxu0 0.0
    %1956 = vmatprep.subr.mxu0 0.0
    %1957 = vmatpush2.msra.mxu0 0.0
    %1958 = vmatprep.subr.mxu0 0.0
    %1959 = vmatpush2.msra.mxu0 0.0
    %1960 = vmatprep.subr.mxu0 0.0
    %1961 = vmatpush2.msra.mxu0 0.0
    %1962 = vmatprep.subr.mxu0 0.0
    %1963 = vmatpush2.msra.mxu0 0.0
    %1964 = vmatprep.subr.mxu0 0.0
    %1965 = vmatpush2.msra.mxu0 0.0
    %1966 = vmatprep.subr.mxu0 0.0
    %1967 = vmatpush2.msra.mxu0 0.0
    %1968 = vmatprep.subr.mxu0 0.0
    %1969 = vmatpush2.msra.mxu0 0.0
    %1970 = vmatprep.subr.mxu0 0.0
    %1971 = vmatpush2.msra.mxu0 0.0
    %1972 = vmatprep.subr.mxu0 0.0
    %1973 = vmatpush2.msra.mxu0 0.0
    %1974 = vmatprep.subr.mxu0 0.0
    %1975 = vmatpush2.msra.mxu0 0.0
    %1976 = vmatprep.subr.mxu0 0.0
    %1977 = vmatpush2.msra.mxu0 0.0
    %1978 = vmatprep.subr.mxu0 0.0
    %1979 = vmatpush2.msra.mxu0 0.0
    %1980 = vmatprep.subr.mxu0 0.0
    %1981 = vmatpush2.msra.mxu0 0.0
    %1982 = vmatprep.mubr.f32.mxu0 0.0
    %1983 = vmatmul.mubr.f32.gmra.mxu0 %v312
    %v1984 = vpop.f32.mrf.mxu0
    %v1985 = vadd.f32 %v1466, %v1984
    %v1986 = vpop.f32.mrf.mxu0
    %1987 = vmatprep.mubr.f32.mxu0 0.0
    %1988 = vmatmul.mubr.f32.gmra.mxu0 %v315
    %v1989 = vpop.f32.mrf.mxu0
    %v1990 = vadd.f32 %v1467, %v1989
    %v1991 = vpop.f32.mrf.mxu0
    %1992 = vdwg.mxu0
    %1993 = vmatprep.subr.mxu0 0.0
    %1994 = vmatpush1.msra.mxu0 0.0
    %1995 = vmatprep.subr.mxu0 0.0
    %1996 = vmatpush1.msra.mxu0 0.0
    %1997 = vmatprep.subr.mxu0 0.0
    %1998 = vmatpush1.msra.mxu0 0.0
    %1999 = vmatprep.subr.mxu0 0.0
    %2000 = vmatpush1.msra.mxu0 0.0
    %2001 = vmatprep.subr.mxu0 0.0
    %2002 = vmatpush1.msra.mxu0 0.0
    %2003 = vmatprep.subr.mxu0 0.0
    %2004 = vmatpush1.msra.mxu0 0.0
    %2005 = vmatprep.subr.mxu0 0.0
    %2006 = vmatpush1.msra.mxu0 0.0
    %2007 = vmatprep.subr.mxu0 0.0
    %2008 = vmatpush1.msra.mxu0 0.0
    %2009 = vmatprep.subr.mxu0 0.0
    %2010 = vmatpush1.msra.mxu0 0.0
    %2011 = vmatprep.subr.mxu0 0.0
    %2012 = vmatpush1.msra.mxu0 0.0
    %2013 = vmatprep.subr.mxu0 0.0
    %2014 = vmatpush1.msra.mxu0 0.0
    %2015 = vmatprep.subr.mxu0 0.0
    %2016 = vmatpush1.msra.mxu0 0.0
    %2017 = vmatprep.subr.mxu0 0.0
    %2018 = vmatpush1.msra.mxu0 0.0
    %2019 = vmatprep.subr.mxu0 0.0
    %2020 = vmatpush1.msra.mxu0 0.0
    %2021 = vmatprep.subr.mxu0 0.0
    %2022 = vmatpush1.msra.mxu0 %v1990
    %2023 = vmatprep.subr.mxu0 0.0
    %2024 = vmatpush1.msra.mxu0 %v1985
    %2025 = vmatprep.subr.mxu0 0.0
    %2026 = vmatpush2.msra.mxu0 0.0
    %2027 = vmatprep.subr.mxu0 0.0
    %2028 = vmatpush2.msra.mxu0 0.0
    %2029 = vmatprep.subr.mxu0 0.0
    %2030 = vmatpush2.msra.mxu0 0.0
    %2031 = vmatprep.subr.mxu0 0.0
    %2032 = vmatpush2.msra.mxu0 0.0
    %2033 = vmatprep.subr.mxu0 0.0
    %2034 = vmatpush2.msra.mxu0 0.0
    %2035 = vmatprep.subr.mxu0 0.0
    %2036 = vmatpush2.msra.mxu0 0.0
    %2037 = vmatprep.subr.mxu0 0.0
    %2038 = vmatpush2.msra.mxu0 0.0
    %2039 = vmatprep.subr.mxu0 0.0
    %2040 = vmatpush2.msra.mxu0 0.0
    %2041 = vmatprep.subr.mxu0 0.0
    %2042 = vmatpush2.msra.mxu0 0.0
    %2043 = vmatprep.subr.mxu0 0.0
    %2044 = vmatpush2.msra.mxu0 0.0
    %2045 = vmatprep.subr.mxu0 0.0
    %2046 = vmatpush2.msra.mxu0 0.0
    %2047 = vmatprep.subr.mxu0 0.0
    %2048 = vmatpush2.msra.mxu0 0.0
    %2049 = vmatprep.subr.mxu0 0.0
    %2050 = vmatpush2.msra.mxu0 0.0
    %2051 = vmatprep.subr.mxu0 0.0
    %2052 = vmatpush2.msra.mxu0 0.0
    %2053 = vmatprep.subr.mxu0 0.0
    %2054 = vmatpush2.msra.mxu0 0.0
    %2055 = vmatprep.subr.mxu0 0.0
    %2056 = vmatpush2.msra.mxu0 0.0
    %2057 = vmatprep.mubr.f32.mxu0 0.0
    %2058 = vmatmul.mubr.f32.gmra.mxu0 %v312
    %v2059 = vpop.f32.mrf.mxu0
    %v2060 = vadd.f32 %v1466, %v2059
    %v2061 = vpop.f32.mrf.mxu0
    %2062 = vmatprep.mubr.f32.mxu0 0.0
    %2063 = vmatmul.mubr.f32.gmra.mxu0 %v315
    %v2064 = vpop.f32.mrf.mxu0
    %v2065 = vadd.f32 %v1467, %v2064
    %v2066 = vpop.f32.mrf.mxu0
    %2067 = vdwg.mxu0
    %2068 = vmatprep.subr.mxu0 0.0
    %2069 = vmatpush1.msra.mxu0 0.0
    %2070 = vmatprep.subr.mxu0 0.0
    %2071 = vmatpush1.msra.mxu0 0.0
    %2072 = vmatprep.subr.mxu0 0.0
    %2073 = vmatpush1.msra.mxu0 0.0
    %2074 = vmatprep.subr.mxu0 0.0
    %2075 = vmatpush1.msra.mxu0 0.0
    %2076 = vmatprep.subr.mxu0 0.0
    %2077 = vmatpush1.msra.mxu0 0.0
    %2078 = vmatprep.subr.mxu0 0.0
    %2079 = vmatpush1.msra.mxu0 0.0
    %2080 = vmatprep.subr.mxu0 0.0
    %2081 = vmatpush1.msra.mxu0 0.0
    %2082 = vmatprep.subr.mxu0 0.0
    %2083 = vmatpush1.msra.mxu0 0.0
    %2084 = vmatprep.subr.mxu0 0.0
    %2085 = vmatpush1.msra.mxu0 0.0
    %2086 = vmatprep.subr.mxu0 0.0
    %2087 = vmatpush1.msra.mxu0 0.0
    %2088 = vmatprep.subr.mxu0 0.0
    %2089 = vmatpush1.msra.mxu0 0.0
    %2090 = vmatprep.subr.mxu0 0.0
    %2091 = vmatpush1.msra.mxu0 0.0
    %2092 = vmatprep.subr.mxu0 0.0
    %2093 = vmatpush1.msra.mxu0 0.0
    %2094 = vmatprep.subr.mxu0 0.0
    %2095 = vmatpush1.msra.mxu0 0.0
    %2096 = vmatprep.subr.mxu0 0.0
    %2097 = vmatpush1.msra.mxu0 %v2065
    %2098 = vmatprep.subr.mxu0 0.0
    %2099 = vmatpush1.msra.mxu0 %v2060
    %2100 = vmatprep.subr.mxu0 0.0
    %2101 = vmatpush2.msra.mxu0 0.0
    %2102 = vmatprep.subr.mxu0 0.0
    %2103 = vmatpush2.msra.mxu0 0.0
    %2104 = vmatprep.subr.mxu0 0.0
    %2105 = vmatpush2.msra.mxu0 0.0
    %2106 = vmatprep.subr.mxu0 0.0
    %2107 = vmatpush2.msra.mxu0 0.0
    %2108 = vmatprep.subr.mxu0 0.0
    %2109 = vmatpush2.msra.mxu0 0.0
    %2110 = vmatprep.subr.mxu0 0.0
    %2111 = vmatpush2.msra.mxu0 0.0
    %2112 = vmatprep.subr.mxu0 0.0
    %2113 = vmatpush2.msra.mxu0 0.0
    %2114 = vmatprep.subr.mxu0 0.0
    %2115 = vmatpush2.msra.mxu0 0.0
    %2116 = vmatprep.subr.mxu0 0.0
    %2117 = vmatpush2.msra.mxu0 0.0
    %2118 = vmatprep.subr.mxu0 0.0
    %2119 = vmatpush2.msra.mxu0 0.0
    %2120 = vmatprep.subr.mxu0 0.0
    %2121 = vmatpush2.msra.mxu0 0.0
    %2122 = vmatprep.subr.mxu0 0.0
    %2123 = vmatpush2.msra.mxu0 0.0
    %2124 = vmatprep.subr.mxu0 0.0
    %2125 = vmatpush2.msra.mxu0 0.0
    %2126 = vmatprep.subr.mxu0 0.0
    %2127 = vmatpush2.msra.mxu0 0.0
    %2128 = vmatprep.subr.mxu0 0.0
    %2129 = vmatpush2.msra.mxu0 0.0
    %2130 = vmatprep.subr.mxu0 0.0
    %2131 = vmatpush2.msra.mxu0 0.0
    %2132 = vmatprep.mubr.f32.mxu0 0.0
    %2133 = vmatmul.mubr.f32.gmra.mxu0 %v312
    %v2134 = vpop.f32.mrf.mxu0
    %v2135 = vadd.f32 %v1466, %v2134
    %v2136 = vpop.f32.mrf.mxu0
    %2137 = vmatprep.mubr.f32.mxu0 0.0
    %2138 = vmatmul.mubr.f32.gmra.mxu0 %v315
    %v2139 = vpop.f32.mrf.mxu0
    %v2140 = vadd.f32 %v1467, %v2139
    %v2141 = vpop.f32.mrf.mxu0
    %2142 = vdwg.mxu0
    %2143 = vmatprep.subr.mxu0 0.0
    %2144 = vmatpush1.msra.mxu0 0.0
    %2145 = vmatprep.subr.mxu0 0.0
    %2146 = vmatpush1.msra.mxu0 0.0
    %2147 = vmatprep.subr.mxu0 0.0
    %2148 = vmatpush1.msra.mxu0 0.0
    %2149 = vmatprep.subr.mxu0 0.0
    %2150 = vmatpush1.msra.mxu0 0.0
    %2151 = vmatprep.subr.mxu0 0.0
    %2152 = vmatpush1.msra.mxu0 0.0
    %2153 = vmatprep.subr.mxu0 0.0
    %2154 = vmatpush1.msra.mxu0 0.0
    %2155 = vmatprep.subr.mxu0 0.0
    %2156 = vmatpush1.msra.mxu0 0.0
    %2157 = vmatprep.subr.mxu0 0.0
    %2158 = vmatpush1.msra.mxu0 0.0
    %2159 = vmatprep.subr.mxu0 0.0
    %2160 = vmatpush1.msra.mxu0 0.0
    %2161 = vmatprep.subr.mxu0 0.0
    %2162 = vmatpush1.msra.mxu0 0.0
    %2163 = vmatprep.subr.mxu0 0.0
    %2164 = vmatpush1.msra.mxu0 0.0
    %2165 = vmatprep.subr.mxu0 0.0
    %2166 = vmatpush1.msra.mxu0 0.0
    %2167 = vmatprep.subr.mxu0 0.0
    %2168 = vmatpush1.msra.mxu0 0.0
    %2169 = vmatprep.subr.mxu0 0.0
    %2170 = vmatpush1.msra.mxu0 0.0
    %2171 = vmatprep.subr.mxu0 0.0
    %2172 = vmatpush1.msra.mxu0 %v2140
    %2173 = vmatprep.subr.mxu0 0.0
    %2174 = vmatpush1.msra.mxu0 %v2135
    %2175 = vmatprep.subr.mxu0 0.0
    %2176 = vmatpush2.msra.mxu0 0.0
    %2177 = vmatprep.subr.mxu0 0.0
    %2178 = vmatpush2.msra.mxu0 0.0
    %2179 = vmatprep.subr.mxu0 0.0
    %2180 = vmatpush2.msra.mxu0 0.0
    %2181 = vmatprep.subr.mxu0 0.0
    %2182 = vmatpush2.msra.mxu0 0.0
    %2183 = vmatprep.subr.mxu0 0.0
    %2184 = vmatpush2.msra.mxu0 0.0
    %2185 = vmatprep.subr.mxu0 0.0
    %2186 = vmatpush2.msra.mxu0 0.0
    %2187 = vmatprep.subr.mxu0 0.0
    %2188 = vmatpush2.msra.mxu0 0.0
    %2189 = vmatprep.subr.mxu0 0.0
    %2190 = vmatpush2.msra.mxu0 0.0
    %2191 = vmatprep.subr.mxu0 0.0
    %2192 = vmatpush2.msra.mxu0 0.0
    %2193 = vmatprep.subr.mxu0 0.0
    %2194 = vmatpush2.msra.mxu0 0.0
    %2195 = vmatprep.subr.mxu0 0.0
    %2196 = vmatpush2.msra.mxu0 0.0
    %2197 = vmatprep.subr.mxu0 0.0
    %2198 = vmatpush2.msra.mxu0 0.0
    %2199 = vmatprep.subr.mxu0 0.0
    %2200 = vmatpush2.msra.mxu0 0.0
    %2201 = vmatprep.subr.mxu0 0.0
    %2202 = vmatpush2.msra.mxu0 0.0
    %2203 = vmatprep.subr.mxu0 0.0
    %2204 = vmatpush2.msra.mxu0 0.0
    %2205 = vmatprep.subr.mxu0 0.0
    %2206 = vmatpush2.msra.mxu0 0.0
    %2207 = vmatprep.mubr.f32.mxu0 0.0
    %2208 = vmatmul.mubr.f32.gmra.mxu0 %v312
    %v2209 = vpop.f32.mrf.mxu0
    %v2210 = vadd.f32 %v1466, %v2209
    %v2211 = vpop.f32.mrf.mxu0
    %2212 = vmatprep.mubr.f32.mxu0 0.0
    %2213 = vmatmul.mubr.f32.gmra.mxu0 %v315
    %v2214 = vpop.f32.mrf.mxu0
    %v2215 = vadd.f32 %v1467, %v2214
    %v2216 = vpop.f32.mrf.mxu0
    %2217 = vdwg.mxu0
    %2218 = vst [vmem:[#allocation15] sm:$0xff] %v2210
    %2219 = vst [vmem:[#allocation15 + $0x8] sm:$0xff] %v2215
    // Predicated region
    $region74: #{tpu_custom_call.1} parent=1 // pred_check
      _
    $region75: #{tpu_custom_call.1} parent=1 // pred_check_branch
      %2221 = sbr.rel (0) target = $region77
    $region76: #{tpu_custom_call.1} parent=1 // pred_region
      %s2223 = ssub.s32 256, 256
      %2224 = vsyncadd [#allocation5], %s2223
      %s2225 = sshll.u32 [#allocation15], 4
      %s2226 = int_to_ptr.vmem [resolvable:$true] %s2225
      %2231 = dma.vmem_to_hbm [thread:$0]  %s2226, 256, %s12, [#allocation5], 128, 128, 8
    $region77: #{tpu_custom_call.1} parent=1 // pred_fallthru
      _
    // Predicated region
    $region78: #{tpu_custom_call.1} parent=1 // pred_check
      _
    $region79: #{tpu_custom_call.1} parent=1 // pred_check_branch
      %2233 = sbr.rel (0) target = $region81
    $region80: #{tpu_custom_call.1} parent=1 // pred_region
      %2234 = dma.done [#allocation5], 256
    $region81: #{tpu_custom_call.1} parent=1 // pred_fallthru
      _
    %2235 = vsyncpa [#allocation4], 1
    %2236 = vsyncpa [#allocation8], 1
    %2237 = vsyncpa [#allocation11], 1
    %2238 = vsyncpa [#allocation5], 1
    %2239 = vsyncpa [#allocation6], 1
    %2240 = vsyncpa [#allocation14], 1

</llo_original>
